<compile_context>
chip_gen: v5e
topology: v5e:2x2
jax: 0.10.0
libtpu: 0.0.40
codegen_flags: <defaults>
</compile_context>

<pallas_src>
import functools

import jax
import jax.numpy as jnp
from jax.experimental import pallas as pl
from jax.experimental.pallas import tpu as pltpu


# ----------------------------------------------------------------------------
# Matmul helpers (MXU, bf16 operands, f32 accumulation)
# ----------------------------------------------------------------------------
def _mm(a, b):
    return jnp.dot(a.astype(jnp.bfloat16), b.astype(jnp.bfloat16),
                   preferred_element_type=jnp.float32)


def _mm_nt(a, b):  # a @ b.T  (contract last dims)
    return jax.lax.dot_general(a.astype(jnp.bfloat16), b.astype(jnp.bfloat16),
                               (((1,), (1,)), ((), ())),
                               preferred_element_type=jnp.float32)


def _mm_tn(a, b):  # a.T @ b  (contract first dims)
    return jax.lax.dot_general(a.astype(jnp.bfloat16), b.astype(jnp.bfloat16),
                               (((0,), (0,)), ((), ())),
                               preferred_element_type=jnp.float32)


# ----------------------------------------------------------------------------
# K1: MLP autoencoder (x_imp, bottleneck z) + fused GAE layer-1 feature transform
# ----------------------------------------------------------------------------
def _mlp_kernel(x_ref, w1_ref, b1_ref, w2_ref, b2_ref, w3_ref, b3_ref,
                w4_ref, b4_ref, gw1_ref, x_imp_ref, z_ref, h0_ref):
    # TODO(synk): Dropout(p=0.3) is an eval-mode no-op and is omitted.
    xb = x_ref[...].astype(jnp.bfloat16)              # cast once; reused by two matmuls
    h1 = jnp.maximum(_mm(xb, w1_ref[...]) + b1_ref[...], 0.0)
    z = _mm(h1, w2_ref[...]) + b2_ref[...]            # bottleneck (f32)
    d1 = jnp.maximum(_mm(z, w3_ref[...]) + b3_ref[...], 0.0)
    x_imp_ref[...] = jnp.maximum(_mm(d1, w4_ref[...]) + b4_ref[...], 0.0)
    z_ref[...] = z
    # GAE layer-1 feature transform fused here (x already resident in VMEM).
    h0_ref[...] = _mm(xb, gw1_ref[...]).astype(jnp.bfloat16)


# ----------------------------------------------------------------------------
# K2: Gumbel-kNN row weights + partial column sums (for symmetrized-graph degrees)
# ----------------------------------------------------------------------------
def _edge_kernel(z_blk_ref, z_full_ref, sq_col_ref, gum_ref,
                 w_ref, colsum_ref, *, k, tau):
    i = pl.program_id(0)
    zb = z_blk_ref[...]                                     # (tb, Z) f32
    tb = zb.shape[0]
    n = z_full_ref.shape[0]

    # Squared euclidean distances: ||zi||^2 + ||zj||^2 - 2 zi.zj (Gram on MXU in bf16).
    sq_row = jnp.sum(zb * zb, axis=-1, keepdims=True)       # (tb, 1) lane reduce
    zz = _mm_nt(zb, z_full_ref[...])                        # (tb, N) f32 accumulation
    d = jnp.maximum(sq_row + sq_col_ref[...] - 2.0 * zz, 0.0)

    score = (-d + gum_ref[...].astype(jnp.float32)) / tau
    col = jax.lax.broadcasted_iota(jnp.int32, (tb, n), 1)
    row = i * tb + jax.lax.broadcasted_iota(jnp.int32, (tb, n), 0)
    neg_inf = jnp.float32(-jnp.inf)
    score = jnp.where(row == col, neg_inf, score)           # no self edge in kNN

    # top-k per row (k static -> unrolled).  No tie-break reduction: continuous Gumbel
    # noise makes exact ties measure-zero, so `work >= m` selects one new column.
    work = score
    mask = jnp.zeros((tb, n), jnp.bool_)
    for _ in range(k):
        m = jnp.max(work, axis=-1, keepdims=True)
        sel = work >= m
        mask = jnp.logical_or(mask, sel)
        work = jnp.where(sel, neg_inf, work)

    # Gumbel-softmax edge weights over the selected neighbours (rows sum to 1).
    mrow = jnp.max(jnp.where(mask, score, neg_inf), axis=-1, keepdims=True)
    w = jnp.where(mask, jnp.exp(score - mrow), 0.0)
    w = w / jnp.sum(w, axis=-1, keepdims=True)

    w_ref[...] = w.astype(jnp.bfloat16)                     # lane-dense (tb, N) store
    # Partial column sums over this row block (replicated across 8 sublanes so the
    # store stays (8,128)-tiled).
    cs = jnp.sum(w, axis=0, keepdims=True)                  # (1, N)
    colsum_ref[...] = jnp.broadcast_to(cs, (8, n))


# ----------------------------------------------------------------------------
# K3 / K4: GCN propagation with the normalized adjacency applied implicitly.
#   adj @ H (row block B) = D_B^-1/2 [ 0.5 W_B (D^-1/2 H) + 0.5 (W^T)_B (D^-1/2 H)
#                                      + (D^-1/2 H)_B ]
# ----------------------------------------------------------------------------
def _gcn1_kernel(w_row_ref, w_col_ref, h0_full_ref, h0_blk_ref,
                 dinv_full_ref, dinv_blk_ref, gb1_ref, gw2_ref, h1_ref):
    dinv_b = dinv_blk_ref[...]                              # (tb, 1)
    sh = (h0_full_ref[...].astype(jnp.float32) * dinv_full_ref[...]).astype(jnp.bfloat16)
    sh_b = h0_blk_ref[...].astype(jnp.float32) * dinv_b     # self-loop term (f32)
    t_row = _mm(w_row_ref[...], sh)                         # W_B     @ SH   (tb, H)
    t_col = _mm_tn(w_col_ref[...], sh)                      # (W^T)_B @ SH   (tb, H)
    g1 = jnp.maximum(dinv_b * (0.5 * (t_row + t_col) + sh_b) + gb1_ref[...], 0.0)
    h1_ref[...] = _mm(g1, gw2_ref[...]).astype(jnp.bfloat16)


def _gcn2_kernel(w_row_ref, w_col_ref, h1_full_ref, h1_blk_ref,
                 dinv_full_ref, dinv_blk_ref, gb2_ref, gwd_ref, gbd_ref, sf_ref,
                 x_rec_ref):
    dinv_b = dinv_blk_ref[...]
    sh = (h1_full_ref[...].astype(jnp.float32) * dinv_full_ref[...]).astype(jnp.bfloat16)
    sh_b = h1_blk_ref[...].astype(jnp.float32) * dinv_b
    t_row = _mm(w_row_ref[...], sh)
    t_col = _mm_tn(w_col_ref[...], sh)
    g2 = dinv_b * (0.5 * (t_row + t_col) + sh_b) + gb2_ref[...]
    dec = jnp.maximum(_mm(g2, gwd_ref[...]) + gbd_ref[...], 0.0)
    x_rec_ref[...] = dec * sf_ref[...]                      # lane-dense (tb, G) store


# ----------------------------------------------------------------------------
# Per-generation tuning helpers
# ----------------------------------------------------------------------------
def _device_kind():
    try:
        return jax.devices()[0].device_kind.lower()
    except Exception:
        return ""


def _vmem_limit_bytes():
    # Stay safely under physical VMEM: 64 MiB/TC on v7x, 128 MiB on v5e/v6e.
    return 48 * 1024 * 1024 if "v7" in _device_kind() else 64 * 1024 * 1024


def _auto_row_tile(n):
    # v5e's 128x128 MXU is full at 128 rows; v6e/v7x have 256-wide MXUs -> prefer 256.
    kind = _device_kind()
    pref = 128 if ("v5 lite" in kind or "v5e" in kind) else 256
    if n <= pref:
        return n
    t = (pref // 8) * 8
    while t >= 8:
        if n % t == 0:
            return t
        t -= 8
    return n


_PARAM_ORDER_MLP = ("mlp_w1", "mlp_b1", "mlp_w2", "mlp_b2",
                    "mlp_w3", "mlp_b3", "mlp_w4", "mlp_b4")


# ----------------------------------------------------------------------------
# Full forward
# ----------------------------------------------------------------------------
def integrated_model_forward(x, size_factors, params, *, k=5, tau=1.0,
                             noise_key=None, row_tile=None):
    n, g = x.shape
    z_dim = params["mlp_w2"].shape[1]
    h_gae = params["gae_w1"].shape[1]
    assert k < n, "k must be smaller than the number of cells"
    if noise_key is None:
        noise_key = jax.random.PRNGKey(42)
    if row_tile is None:
        row_tile = _auto_row_tile(n)
    assert n % row_tile == 0 and (row_tile % 8 == 0 or row_tile == n)
    nb = n // row_tile

    x = x.astype(jnp.float32)
    sf = size_factors.reshape(-1, 1).astype(jnp.float32)

    # TODO(synk): generate Gumbel noise in-kernel (pltpu.prng_seed / prng_random_bits) on
    # the compiled TPU path; host-side bf16 noise is used because the in-kernel PRNG
    # primitives failed to lower in this environment. bf16 halves the N^2 HBM stream.
    gumbel = jax.random.gumbel(noise_key, (n, n), jnp.float32).astype(jnp.bfloat16)

    cparams = pltpu.CompilerParams(dimension_semantics=("parallel",),
                                   vmem_limit_bytes=_vmem_limit_bytes())

    def row_spec(d):                       # per-row-block stream
        return pl.BlockSpec((row_tile, d), lambda i: (i, 0))

    def res_spec(shape):                   # grid-resident (constant index map)
        nd = len(shape)
        return pl.BlockSpec(shape, lambda i, _nd=nd: (0,) * _nd)

    col_spec = pl.BlockSpec((n, row_tile), lambda i: (0, i))   # column slab of W
    vec_spec = pl.BlockSpec((row_tile, 1), lambda i: (i, 0))   # per-block (tb,1) vector

    # ---- K1: MLP autoencoder (+ fused GAE layer-1 feature transform) -------------------
    mlp_ws = [params[name] for name in _PARAM_ORDER_MLP]
    x_imp, z, h0 = pl.pallas_call(
        _mlp_kernel,
        grid=(nb,),
        in_specs=[row_spec(g)] + [res_spec(p.shape) for p in mlp_ws]
                 + [res_spec(params["gae_w1"].shape)],
        out_specs=(row_spec(g), row_spec(z_dim), row_spec(h_gae)),
        out_shape=(jax.ShapeDtypeStruct((n, g), jnp.float32),
                   jax.ShapeDtypeStruct((n, z_dim), jnp.float32),
                   jax.ShapeDtypeStruct((n, h_gae), jnp.bfloat16)),
        compiler_params=cparams,
    )(x, *mlp_ws, params["gae_w1"])

    # ---- K2: Gumbel-kNN edge weights + partial column sums -----------------------------
    sq_col = jnp.sum(z * z, axis=1).reshape(1, n)   # tiny O(N*Z) glue, (1,N) orientation
    w, colsum_p = pl.pallas_call(
        functools.partial(_edge_kernel, k=k, tau=tau),
        grid=(nb,),
        in_specs=[row_spec(z_dim), res_spec((n, z_dim)), res_spec((1, n)), row_spec(n)],
        out_specs=(row_spec(n), pl.BlockSpec((8, n), lambda i: (i, 0))),
        out_shape=(jax.ShapeDtypeStruct((n, n), jnp.bfloat16),
                   jax.ShapeDtypeStruct((8 * nb, n), jnp.float32)),
        compiler_params=cparams,
    )(z, z, sq_col, gumbel)

    # Degrees of A = 0.5*(W + W^T) + I: softmax rows of W sum to 1 exactly, so
    # deg = 1.5 + 0.5 * colsum(W).  Tiny O(N) glue in plain JAX.
    colsum = jnp.sum(colsum_p.reshape(nb, 8, n)[:, 0, :], axis=0)
    dinv = jax.lax.rsqrt(1.5 + 0.5 * colsum).reshape(n, 1).astype(jnp.float32)

    # ---- K3: GCN layer 1 (h1 = relu(adj @ h0 + b1) @ w2) -------------------------------
    h1 = pl.pallas_call(
        _gcn1_kernel,
        grid=(nb,),
        in_specs=[row_spec(n), col_spec, res_spec((n, h_gae)), row_spec(h_gae),
                  res_spec((n, 1)), vec_spec,
                  res_spec(params["gae_b1"].shape), res_spec(params["gae_w2"].shape)],
        out_specs=row_spec(h_gae),
        out_shape=jax.ShapeDtypeStruct((n, h_gae), jnp.bfloat16),
        compiler_params=cparams,
    )(w, w, h0, h0, dinv, dinv, params["gae_b1"], params["gae_w2"])

    # ---- K4: GCN layer 2 + decoder + size-factor scaling -------------------------------
    x_rec = pl.pallas_call(
        _gcn2_kernel,
        grid=(nb,),
        in_specs=[row_spec(n), col_spec, res_spec((n, h_gae)), row_spec(h_gae),
                  res_spec((n, 1)), vec_spec,
                  res_spec(params["gae_b2"].shape), res_spec(params["gae_wdec"].shape),
                  res_spec(params["gae_bdec"].shape), vec_spec],
        out_specs=row_spec(g),
        out_shape=jax.ShapeDtypeStruct((n, g), jnp.float32),
        compiler_params=cparams,
    )(w, w, h1, h1, dinv, dinv, params["gae_b2"], params["gae_wdec"],
      params["gae_bdec"], sf)

    return x_imp, x_rec


# ----------------------------------------------------------------------------
# Parameter init
# ----------------------------------------------------------------------------
def _glorot(key, shape):
    fan_in, fan_out = shape
    lim = (6.0 / (fan_in + fan_out)) ** 0.5
    # Weights stored bf16 (MXU-native, half the DMA bytes).
    return jax.random.uniform(key, shape, jnp.float32, -lim, lim).astype(jnp.bfloat16)


def init_params(key, g, h_ae, z_dim, h_gae):
    ks = jax.random.split(key, 7)
    zeros = lambda o: jnp.zeros((1, o), jnp.float32)
    return {
        # MLP autoencoder (projection head)
        "mlp_w1": _glorot(ks[0], (g, h_ae)),      "mlp_b1": zeros(h_ae),
        "mlp_w2": _glorot(ks[1], (h_ae, z_dim)),  "mlp_b2": zeros(z_dim),
        "mlp_w3": _glorot(ks[2], (z_dim, h_ae)),  "mlp_b3": zeros(h_ae),
        "mlp_w4": _glorot(ks[3], (h_ae, g)),      "mlp_b4": zeros(g),
        # GAE (graph autoencoder imputation head)
        "gae_w1":   _glorot(ks[4], (g, h_gae)),     "gae_b1":   zeros(h_gae),
        "gae_w2":   _glorot(ks[5], (h_gae, h_gae)), "gae_b2":   zeros(h_gae),
        "gae_wdec": _glorot(ks[6], (h_gae, g)),     "gae_bdec": zeros(g),
    }


if __name__ == "__main__":
    # Small, TPU-friendly shapes (all matmul/store dims multiples of 128).  row_tile=128
    # forces a 2-block grid so the row-tiled "parallel" path and the cross-block W
    # column-slab reads are exercised.
    N_CELLS, N_GENES = 256, 256
    Z_DIM, H_AE, H_GAE, K = 128, 128, 128, 5

    key = jax.random.PRNGKey(0)
    kx, ks, kp, kn = jax.random.split(key, 4)
    x = jax.random.uniform(kx, (N_CELLS, N_GENES), jnp.float32, 0.0, 2.0)   # count-like
    size_factors = jax.random.uniform(ks, (N_CELLS,), jnp.float32, 0.5, 1.5)

    params = init_params(kp, N_GENES, H_AE, Z_DIM, H_GAE)

    x_imp, x_rec = integrated_model_forward(x, size_factors, params,
                                            k=K, tau=1.0, noise_key=kn, row_tile=128)
    jax.block_until_ready((x_imp, x_rec))

    assert x_imp.shape == (N_CELLS, N_GENES) and x_rec.shape == (N_CELLS, N_GENES)
    assert bool(jnp.all(jnp.isfinite(x_imp))) and bool(jnp.all(jnp.isfinite(x_rec)))
    print("KERNEL_OK")
</pallas_src>

<mosaic_0001>
module attributes {stable_mosaic.version = 11 : i64} {
  func.func @_mlp_kernel(%arg0: i32, %arg1: memref<128x256xf32, #tpu.memory_space<vmem>>, %arg2: memref<256x128xbf16, #tpu.memory_space<vmem>>, %arg3: memref<1x128xf32, #tpu.memory_space<vmem>>, %arg4: memref<128x128xbf16, #tpu.memory_space<vmem>>, %arg5: memref<1x128xf32, #tpu.memory_space<vmem>>, %arg6: memref<128x128xbf16, #tpu.memory_space<vmem>>, %arg7: memref<1x128xf32, #tpu.memory_space<vmem>>, %arg8: memref<128x256xbf16, #tpu.memory_space<vmem>>, %arg9: memref<1x256xf32, #tpu.memory_space<vmem>>, %arg10: memref<256x128xbf16, #tpu.memory_space<vmem>>, %arg11: memref<128x256xf32, #tpu.memory_space<vmem>>, %arg12: memref<128x128xf32, #tpu.memory_space<vmem>>, %arg13: memref<128x128xbf16, #tpu.memory_space<vmem>>) attributes {dimension_semantics = [#tpu.dimension_semantics<parallel>], iteration_bounds = array<i64: 2>, scalar_prefetch = 0 : i64, scratch_operands = 0 : i64, tpu.core_type = #tpu.core_type<tc>, window_params = [{transform_indices = @transform_0, window_bounds = array<i64: 128, 256>}, {pipeline_mode = #tpu.pipeline_mode<synchronous>, transform_indices = @transform_1, window_bounds = array<i64: 256, 128>}, {pipeline_mode = #tpu.pipeline_mode<synchronous>, transform_indices = @transform_2, window_bounds = array<i64: 1, 128>}, {pipeline_mode = #tpu.pipeline_mode<synchronous>, transform_indices = @transform_3, window_bounds = array<i64: 128, 128>}, {pipeline_mode = #tpu.pipeline_mode<synchronous>, transform_indices = @transform_4, window_bounds = array<i64: 1, 128>}, {pipeline_mode = #tpu.pipeline_mode<synchronous>, transform_indices = @transform_5, window_bounds = array<i64: 128, 128>}, {pipeline_mode = #tpu.pipeline_mode<synchronous>, transform_indices = @transform_6, window_bounds = array<i64: 1, 128>}, {pipeline_mode = #tpu.pipeline_mode<synchronous>, transform_indices = @transform_7, window_bounds = array<i64: 128, 256>}, {pipeline_mode = #tpu.pipeline_mode<synchronous>, transform_indices = @transform_8, window_bounds = array<i64: 1, 256>}, {pipeline_mode = #tpu.pipeline_mode<synchronous>, transform_indices = @transform_9, window_bounds = array<i64: 256, 128>}, {transform_indices = @transform_10, window_bounds = array<i64: 128, 256>}, {transform_indices = @transform_11, window_bounds = array<i64: 128, 128>}, {transform_indices = @transform_12, window_bounds = array<i64: 128, 128>}]} {
    %c0 = arith.constant 0 : index
    %c0_0 = arith.constant 0 : index
    %0 = vector.load %arg1[%c0, %c0_0] : memref<128x256xf32, #tpu.memory_space<vmem>>, vector<128x256xf32>
    %1 = arith.truncf %0 : vector<128x256xf32> to vector<128x256xbf16>
    %c0_1 = arith.constant 0 : index
    %c0_2 = arith.constant 0 : index
    %2 = vector.load %arg2[%c0_1, %c0_2] : memref<256x128xbf16, #tpu.memory_space<vmem>>, vector<256x128xbf16>
    %cst = arith.constant dense<0.000000e+00> : vector<128x128xf32>
    %3 = tpu.matmul %1, %2, %cst {dimension_numbers = #tpu.dot_dimension_numbers<[1], [0], [0], [1], [0, 0, 1, 1], [], []>} : vector<128x256xbf16>, vector<256x128xbf16>, vector<128x128xf32> -> vector<128x128xf32>
    %c0_3 = arith.constant 0 : index
    %c0_4 = arith.constant 0 : index
    %4 = vector.load %arg3[%c0_3, %c0_4] : memref<1x128xf32, #tpu.memory_space<vmem>>, vector<1x128xf32>
    %5 = vector.broadcast %4 : vector<1x128xf32> to vector<128x128xf32>
    %6 = arith.addf %3, %5 : vector<128x128xf32>
    %cst_5 = arith.constant 0.000000e+00 : f32
    %7 = vector.broadcast %cst_5 : f32 to vector<128x128xf32>
    %8 = arith.maximumf %6, %7 : vector<128x128xf32>
    %c0_6 = arith.constant 0 : index
    %c0_7 = arith.constant 0 : index
    %9 = vector.load %arg4[%c0_6, %c0_7] : memref<128x128xbf16, #tpu.memory_space<vmem>>, vector<128x128xbf16>
    %10 = arith.truncf %8 : vector<128x128xf32> to vector<128x128xbf16>
    %cst_8 = arith.constant dense<0.000000e+00> : vector<128x128xf32>
    %11 = tpu.matmul %10, %9, %cst_8 {dimension_numbers = #tpu.dot_dimension_numbers<[1], [0], [0], [1], [0, 0, 1, 1], [], []>} : vector<128x128xbf16>, vector<128x128xbf16>, vector<128x128xf32> -> vector<128x128xf32>
    %c0_9 = arith.constant 0 : index
    %c0_10 = arith.constant 0 : index
    %12 = vector.load %arg5[%c0_9, %c0_10] : memref<1x128xf32, #tpu.memory_space<vmem>>, vector<1x128xf32>
    %13 = vector.broadcast %12 : vector<1x128xf32> to vector<128x128xf32>
    %14 = arith.addf %11, %13 : vector<128x128xf32>
    %c0_11 = arith.constant 0 : index
    %c0_12 = arith.constant 0 : index
    %15 = vector.load %arg6[%c0_11, %c0_12] : memref<128x128xbf16, #tpu.memory_space<vmem>>, vector<128x128xbf16>
    %16 = arith.truncf %14 : vector<128x128xf32> to vector<128x128xbf16>
    %cst_13 = arith.constant dense<0.000000e+00> : vector<128x128xf32>
    %17 = tpu.matmul %16, %15, %cst_13 {dimension_numbers = #tpu.dot_dimension_numbers<[1], [0], [0], [1], [0, 0, 1, 1], [], []>} : vector<128x128xbf16>, vector<128x128xbf16>, vector<128x128xf32> -> vector<128x128xf32>
    %c0_14 = arith.constant 0 : index
    %c0_15 = arith.constant 0 : index
    %18 = vector.load %arg7[%c0_14, %c0_15] : memref<1x128xf32, #tpu.memory_space<vmem>>, vector<1x128xf32>
    %19 = vector.broadcast %18 : vector<1x128xf32> to vector<128x128xf32>
    %20 = arith.addf %17, %19 : vector<128x128xf32>
    %cst_16 = arith.constant 0.000000e+00 : f32
    %21 = vector.broadcast %cst_16 : f32 to vector<128x128xf32>
    %22 = arith.maximumf %20, %21 : vector<128x128xf32>
    %c0_17 = arith.constant 0 : index
    %c0_18 = arith.constant 0 : index
    %23 = vector.load %arg8[%c0_17, %c0_18] : memref<128x256xbf16, #tpu.memory_space<vmem>>, vector<128x256xbf16>
    %24 = arith.truncf %22 : vector<128x128xf32> to vector<128x128xbf16>
    %cst_19 = arith.constant dense<0.000000e+00> : vector<128x256xf32>
    %25 = tpu.matmul %24, %23, %cst_19 {dimension_numbers = #tpu.dot_dimension_numbers<[1], [0], [0], [1], [0, 0, 1, 1], [], []>} : vector<128x128xbf16>, vector<128x256xbf16>, vector<128x256xf32> -> vector<128x256xf32>
    %c0_20 = arith.constant 0 : index
    %c0_21 = arith.constant 0 : index
    %26 = vector.load %arg9[%c0_20, %c0_21] : memref<1x256xf32, #tpu.memory_space<vmem>>, vector<1x256xf32>
    %27 = vector.broadcast %26 : vector<1x256xf32> to vector<128x256xf32>
    %28 = arith.addf %25, %27 : vector<128x256xf32>
    %cst_22 = arith.constant 0.000000e+00 : f32
    %29 = vector.broadcast %cst_22 : f32 to vector<128x256xf32>
    %30 = arith.maximumf %28, %29 : vector<128x256xf32>
    %c0_23 = arith.constant 0 : index
    %c0_24 = arith.constant 0 : index
    %31 = vector.load %arg11[%c0_23, %c0_24] : memref<128x256xf32, #tpu.memory_space<vmem>>, vector<128x256xf32>
    tpu.vector_store %arg11[%c0_23, %c0_24], %30 {strides = array<i32>} : memref<128x256xf32, #tpu.memory_space<vmem>>, vector<128x256xf32>,
    %c0_25 = arith.constant 0 : index
    %c0_26 = arith.constant 0 : index
    %32 = vector.load %arg12[%c0_25, %c0_26] : memref<128x128xf32, #tpu.memory_space<vmem>>, vector<128x128xf32>
    tpu.vector_store %arg12[%c0_25, %c0_26], %14 {strides = array<i32>} : memref<128x128xf32, #tpu.memory_space<vmem>>, vector<128x128xf32>,
    %c0_27 = arith.constant 0 : index
    %c0_28 = arith.constant 0 : index
    %33 = vector.load %arg10[%c0_27, %c0_28] : memref<256x128xbf16, #tpu.memory_space<vmem>>, vector<256x128xbf16>
    %cst_29 = arith.constant dense<0.000000e+00> : vector<128x128xf32>
    %34 = tpu.matmul %1, %33, %cst_29 {dimension_numbers = #tpu.dot_dimension_numbers<[1], [0], [0], [1], [0, 0, 1, 1], [], []>} : vector<128x256xbf16>, vector<256x128xbf16>, vector<128x128xf32> -> vector<128x128xf32>
    %35 = arith.truncf %34 : vector<128x128xf32> to vector<128x128xbf16>
    %c0_30 = arith.constant 0 : index
    %c0_31 = arith.constant 0 : index
    %36 = vector.load %arg13[%c0_30, %c0_31] : memref<128x128xbf16, #tpu.memory_space<vmem>>, vector<128x128xbf16>
    tpu.vector_store %arg13[%c0_30, %c0_31], %35 {strides = array<i32>} : memref<128x128xbf16, #tpu.memory_space<vmem>>, vector<128x128xbf16>,
    return
  }
  func.func @transform_0(%arg0: i32) -> (i32, i32) {
    %c0_i32 = arith.constant 0 : i32
    %c0_i32_0 = arith.constant 0 : i32
    return %arg0, %c0_i32 : i32, i32
  }
  func.func @transform_1(%arg0: i32) -> (i32, i32) {
    %c0_i32 = arith.constant 0 : i32
    %c0_i32_0 = arith.constant 0 : i32
    %c0_i32_1 = arith.constant 0 : i32
    return %c0_i32, %c0_i32_0 : i32, i32
  }
  func.func @transform_2(%arg0: i32) -> (i32, i32) {
    %c0_i32 = arith.constant 0 : i32
    %c0_i32_0 = arith.constant 0 : i32
    %c0_i32_1 = arith.constant 0 : i32
    return %c0_i32, %c0_i32_0 : i32, i32
  }
  func.func @transform_3(%arg0: i32) -> (i32, i32) {
    %c0_i32 = arith.constant 0 : i32
    %c0_i32_0 = arith.constant 0 : i32
    %c0_i32_1 = arith.constant 0 : i32
    return %c0_i32, %c0_i32_0 : i32, i32
  }
  func.func @transform_4(%arg0: i32) -> (i32, i32) {
    %c0_i32 = arith.constant 0 : i32
    %c0_i32_0 = arith.constant 0 : i32
    %c0_i32_1 = arith.constant 0 : i32
    return %c0_i32, %c0_i32_0 : i32, i32
  }
  func.func @transform_5(%arg0: i32) -> (i32, i32) {
    %c0_i32 = arith.constant 0 : i32
    %c0_i32_0 = arith.constant 0 : i32
    %c0_i32_1 = arith.constant 0 : i32
    return %c0_i32, %c0_i32_0 : i32, i32
  }
  func.func @transform_6(%arg0: i32) -> (i32, i32) {
    %c0_i32 = arith.constant 0 : i32
    %c0_i32_0 = arith.constant 0 : i32
    %c0_i32_1 = arith.constant 0 : i32
    return %c0_i32, %c0_i32_0 : i32, i32
  }
  func.func @transform_7(%arg0: i32) -> (i32, i32) {
    %c0_i32 = arith.constant 0 : i32
    %c0_i32_0 = arith.constant 0 : i32
    %c0_i32_1 = arith.constant 0 : i32
    return %c0_i32, %c0_i32_0 : i32, i32
  }
  func.func @transform_8(%arg0: i32) -> (i32, i32) {
    %c0_i32 = arith.constant 0 : i32
    %c0_i32_0 = arith.constant 0 : i32
    %c0_i32_1 = arith.constant 0 : i32
    return %c0_i32, %c0_i32_0 : i32, i32
  }
  func.func @transform_9(%arg0: i32) -> (i32, i32) {
    %c0_i32 = arith.constant 0 : i32
    %c0_i32_0 = arith.constant 0 : i32
    %c0_i32_1 = arith.constant 0 : i32
    return %c0_i32, %c0_i32_0 : i32, i32
  }
  func.func @transform_10(%arg0: i32) -> (i32, i32) {
    %c0_i32 = arith.constant 0 : i32
    %c0_i32_0 = arith.constant 0 : i32
    return %arg0, %c0_i32 : i32, i32
  }
  func.func @transform_11(%arg0: i32) -> (i32, i32) {
    %c0_i32 = arith.constant 0 : i32
    %c0_i32_0 = arith.constant 0 : i32
    return %arg0, %c0_i32 : i32, i32
  }
  func.func @transform_12(%arg0: i32) -> (i32, i32) {
    %c0_i32 = arith.constant 0 : i32
    %c0_i32_0 = arith.constant 0 : i32
    return %arg0, %c0_i32 : i32, i32
  }
}

</mosaic_0001>

<llo_original>
// kernel: tpu_custom_call.1
$region0: #{tpu_custom_call.1}
  #allocation0 [shape = 'u32[]', space=smem, size = 0x4, offset = 0x4, fixed_abs, tag = 'smem constant byte address 0x4 - core index']
  #allocation1 [shape = 'u32[72,128]{1,0:T(1,128)}', space=vmem, size = 0x9000, scoped, tag = 'internal scratch']
  %s0 = inlined_call_operand.hbm [shape: f32[256,256], index: 0, kind: input, shape index: {}]
  %s1 = inlined_call_operand.hbm [shape: bf16[256,128], index: 1, kind: input, shape index: {}]
  %s2 = inlined_call_operand.vmem [shape: f32[1,128], index: 2, kind: input, shape index: {}]
  %s3 = inlined_call_operand.hbm [shape: bf16[128,128], index: 3, kind: input, shape index: {}]
  %s4 = inlined_call_operand.hbm [shape: f32[1,128], index: 4, kind: input, shape index: {}]
  %s5 = inlined_call_operand.hbm [shape: bf16[128,128], index: 5, kind: input, shape index: {}]
  %s6 = inlined_call_operand.vmem [shape: f32[1,128], index: 6, kind: input, shape index: {}]
  %s7 = inlined_call_operand.hbm [shape: bf16[128,256], index: 7, kind: input, shape index: {}]
  %s8 = inlined_call_operand.vmem [shape: f32[1,256], index: 8, kind: input, shape index: {}]
  %s9 = inlined_call_operand.hbm [shape: bf16[256,128], index: 9, kind: input, shape index: {}]
  %s10 = inlined_call_operand.hbm [shape: f32[256,256], index: 10, kind: output, shape index: {0}]
  %s11 = inlined_call_operand.hbm [shape: f32[256,128], index: 11, kind: output, shape index: {1}]
  %s12 = inlined_call_operand.hbm [shape: bf16[256,128], index: 12, kind: output, shape index: {2}]
  %13 = xla_tuple %s10, %s11, %s12
  %s14 = sld [smem:[#allocation0]]
  $region117: #{tpu_custom_call.1} parent=0
    _
  %s16 = ssub.s32 1, %s14
  %s17 = scalar_select 0, %s16, %s14
  $region1: #{tpu_custom_call.1} parent=0
    #allocation2 [shape = 'u8[262144]{0}', space=vmem, size = 0x40000, scoped, tag = 'input window, operand 0']
    #allocation3 [shape = 's32[2]{0}', space=sflag, size = 0x8, scoped, tag = 'scoped memory for tpu_custom_call.1']
    #allocation4 [shape = 's32[2]{0}', space=sflag, size = 0x8, scoped, tag = 'scoped memory for tpu_custom_call.1']
    #allocation5 [shape = 'u8[65536]{0}', space=vmem, size = 0x10000, scoped, tag = 'input window, operand 1, single buffered']
    #allocation6 [shape = 's32[1]{0}', space=sflag, size = 0x4, scoped, tag = 'scoped memory for tpu_custom_call.1']
    #allocation7 [shape = 'u8[32768]{0}', space=vmem, size = 0x8000, scoped, tag = 'input window, operand 3, single buffered']
    #allocation8 [shape = 'u8[512]{0}', space=vmem, size = 0x400, scoped, tag = 'input window, operand 4, single buffered']
    #allocation9 [shape = 's32[1]{0}', space=sflag, size = 0x4, scoped, tag = 'scoped memory for tpu_custom_call.1']
    #allocation10 [shape = 'u8[32768]{0}', space=vmem, size = 0x8000, scoped, tag = 'input window, operand 5, single buffered']
    #allocation11 [shape = 'u8[65536]{0}', space=vmem, size = 0x10000, scoped, tag = 'input window, operand 7, single buffered']
    #allocation12 [shape = 's32[1]{0}', space=sflag, size = 0x4, scoped, tag = 'scoped memory for tpu_custom_call.1']
    #allocation13 [shape = 'u8[65536]{0}', space=vmem, size = 0x10000, scoped, tag = 'input window, operand 9, single buffered']
    #allocation14 [shape = 'u8[262144]{0}', space=vmem, size = 0x40000, scoped, tag = 'output window, operand 0']
    #allocation15 [shape = 'u8[131072]{0}', space=vmem, size = 0x20000, scoped, tag = 'output window, operand 1']
    #allocation16 [shape = 's32[2]{0}', space=sflag, size = 0x8, scoped, tag = 'scoped memory for tpu_custom_call.1']
    #allocation17 [shape = 'u8[65536]{0}', space=vmem, size = 0x10000, scoped, tag = 'output window, operand 2']
    %18 = vsyncpa [#allocation3], 0
    %s19 = scalar_lea.sflag [#allocation3], 1
    %20 = vsyncpa %s19, 0
    %21 = vsyncpa [#allocation6], 0
    %22 = vsyncpa [#allocation9], 0
    %23 = vsyncpa [#allocation12], 0
    %24 = vsyncpa [#allocation4], 0
    %s25 = scalar_lea.sflag [#allocation4], 1
    %26 = vsyncpa %s25, 0
    %27 = vsyncpa [#allocation16], 0
    %s28 = scalar_lea.sflag [#allocation16], 1
    %29 = vsyncpa %s28, 0
    loop: start=0, step=1, limit=4
    $region2: #{tpu_custom_call.1} parent=1 // loop_pre_header
      _
    $region3: #{tpu_custom_call.1} parent=1 // loop_header
      %s31 = sphi 0, %s35
      %p32 = scmp.ge.s32.totalorder %s31, 4
      %s41 = sphi 0, %s43
      %s44 = sphi 0, %s41
      %s45 = sphi 0, %s44
      %s61 = sphi 0, %s45
      %s65 = sphi 0, %s65
      %s67 = sphi 0, %s65
      %s68 = sphi 0, %s67
      %s82 = sphi 0, %s68
      %s86 = sphi 0, %s86
      %s88 = sphi 0, %s86
      %s89 = sphi 0, %s88
      %s103 = sphi 0, %s89
      %s107 = sphi 0, %s107
      %s109 = sphi 0, %s107
      %s110 = sphi 0, %s109
      %s124 = sphi 0, %s110
      %s128 = sphi 0, %s128
      %s130 = sphi 0, %s128
      %s131 = sphi 0, %s130
      %s145 = sphi 0, %s131
      %s149 = sphi 0, %s149
      %s151 = sphi 0, %s149
      %s152 = sphi 0, %s151
      %s166 = sphi 0, %s152
      %s170 = sphi 0, %s170
      %s172 = sphi 0, %s170
      %s173 = sphi 0, %s172
      %s187 = sphi 0, %s173
      %s191 = sphi 0, %s191
      %s193 = sphi 0, %s191
      %s194 = sphi 0, %s193
      %s208 = sphi 0, %s194
      %s212 = sphi 0, %s212
      %s214 = sphi 0, %s212
      %s215 = sphi 0, %s214
      %s229 = sphi 0, %s215
      %s233 = sphi 0, %s233
      %s235 = sphi 0, %s233
      %s236 = sphi 0, %s235
      %s250 = sphi 0, %s236
      %s256 = sphi 0, %s258
      %s259 = sphi 0, %s256
      %s260 = sphi 0, %s259
      %s276 = sphi 0, %s260
      %s282 = sphi 0, %s284
      %s285 = sphi 0, %s282
      %s286 = sphi 0, %s285
      %s302 = sphi 0, %s286
      %s308 = sphi 0, %s310
      %s311 = sphi 0, %s308
      %s312 = sphi 0, %s311
      %s328 = sphi 0, %s312
    $region4: #{tpu_custom_call.1} parent=1 // loop_header_branch
      %34 = sbr.rel (%p32) target = $region8
    $region5: #{tpu_custom_call.1} parent=1 // loop_body
      %s36 = ssub.s32 %s31, 1
      %s37 = ssub.s32 %s31, 2
      %s38 = sadd.s32 %s31, 1
      %s39 = ssub.s32 %s31, %s38
      %p40 = scmp.eq.s32.totalorder %s39, 0
      %s42 = sadd.s32 %s41, 1
      %s43 = scalar_select %p40, %s41, %s42
      %p46 = pneg %p40
      %p47 = scmp.eq.s32.totalorder %s31, 1
      %p48 = por %p46, %p47
      %p49 = scmp.ne.s32.totalorder %s41, %s44
      %p50 = scmp.eq.s32.totalorder %s31, 0
      %p51 = por %p49, %p50
      %p52 = scmp.ne.s32.totalorder %s41, %s44
      %p53 = scmp.eq.s32.totalorder %s36, 1
      %p54 = por %p52, %p53
      %p55 = scmp.ne.s32.totalorder %s44, %s45
      %p56 = scmp.eq.s32.totalorder %s36, 0
      %p57 = por %p55, %p56
      %p58 = scmp.ne.s32.totalorder %s44, %s45
      %p59 = scmp.eq.s32.totalorder %s37, 1
      %p60 = por %p58, %p59
      %p62 = scmp.ne.s32.totalorder %s45, %s61
      %p63 = scmp.eq.s32.totalorder %s37, 0
      %p64 = por %p62, %p63
      %s66 = sadd.s32 %s65, 1
      %p69 = scmp.eq.s32.totalorder %s31, 1
      %p70 = scmp.ne.s32.totalorder %s65, %s67
      %p71 = scmp.eq.s32.totalorder %s31, 0
      %p72 = por %p70, %p71
      %p73 = scmp.ne.s32.totalorder %s65, %s67
      %p74 = scmp.eq.s32.totalorder %s36, 1
      %p75 = por %p73, %p74
      %p76 = scmp.ne.s32.totalorder %s67, %s68
      %p77 = scmp.eq.s32.totalorder %s36, 0
      %p78 = por %p76, %p77
      %p79 = scmp.ne.s32.totalorder %s67, %s68
      %p80 = scmp.eq.s32.totalorder %s37, 1
      %p81 = por %p79, %p80
      %p83 = scmp.ne.s32.totalorder %s68, %s82
      %p84 = scmp.eq.s32.totalorder %s37, 0
      %p85 = por %p83, %p84
      %s87 = sadd.s32 %s86, 1
      %p90 = scmp.eq.s32.totalorder %s31, 1
      %p91 = scmp.ne.s32.totalorder %s86, %s88
      %p92 = scmp.eq.s32.totalorder %s31, 0
      %p93 = por %p91, %p92
      %p94 = scmp.ne.s32.totalorder %s86, %s88
      %p95 = scmp.eq.s32.totalorder %s36, 1
      %p96 = por %p94, %p95
      %p97 = scmp.ne.s32.totalorder %s88, %s89
      %p98 = scmp.eq.s32.totalorder %s36, 0
      %p99 = por %p97, %p98
      %p100 = scmp.ne.s32.totalorder %s88, %s89
      %p101 = scmp.eq.s32.totalorder %s37, 1
      %p102 = por %p100, %p101
      %p104 = scmp.ne.s32.totalorder %s89, %s103
      %p105 = scmp.eq.s32.totalorder %s37, 0
      %p106 = por %p104, %p105
      %s108 = sadd.s32 %s107, 1
      %p111 = scmp.eq.s32.totalorder %s31, 1
      %p112 = scmp.ne.s32.totalorder %s107, %s109
      %p113 = scmp.eq.s32.totalorder %s31, 0
      %p114 = por %p112, %p113
      %p115 = scmp.ne.s32.totalorder %s107, %s109
      %p116 = scmp.eq.s32.totalorder %s36, 1
      %p117 = por %p115, %p116
      %p118 = scmp.ne.s32.totalorder %s109, %s110
      %p119 = scmp.eq.s32.totalorder %s36, 0
      %p120 = por %p118, %p119
      %p121 = scmp.ne.s32.totalorder %s109, %s110
      %p122 = scmp.eq.s32.totalorder %s37, 1
      %p123 = por %p121, %p122
      %p125 = scmp.ne.s32.totalorder %s110, %s124
      %p126 = scmp.eq.s32.totalorder %s37, 0
      %p127 = por %p125, %p126
      %s129 = sadd.s32 %s128, 1
      %p132 = scmp.eq.s32.totalorder %s31, 1
      %p133 = scmp.ne.s32.totalorder %s128, %s130
      %p134 = scmp.eq.s32.totalorder %s31, 0
      %p135 = por %p133, %p134
      %p136 = scmp.ne.s32.totalorder %s128, %s130
      %p137 = scmp.eq.s32.totalorder %s36, 1
      %p138 = por %p136, %p137
      %p139 = scmp.ne.s32.totalorder %s130, %s131
      %p140 = scmp.eq.s32.totalorder %s36, 0
      %p141 = por %p139, %p140
      %p142 = scmp.ne.s32.totalorder %s130, %s131
      %p143 = scmp.eq.s32.totalorder %s37, 1
      %p144 = por %p142, %p143
      %p146 = scmp.ne.s32.totalorder %s131, %s145
      %p147 = scmp.eq.s32.totalorder %s37, 0
      %p148 = por %p146, %p147
      %s150 = sadd.s32 %s149, 1
      %p153 = scmp.eq.s32.totalorder %s31, 1
      %p154 = scmp.ne.s32.totalorder %s149, %s151
      %p155 = scmp.eq.s32.totalorder %s31, 0
      %p156 = por %p154, %p155
      %p157 = scmp.ne.s32.totalorder %s149, %s151
      %p158 = scmp.eq.s32.totalorder %s36, 1
      %p159 = por %p157, %p158
      %p160 = scmp.ne.s32.totalorder %s151, %s152
      %p161 = scmp.eq.s32.totalorder %s36, 0
      %p162 = por %p160, %p161
      %p163 = scmp.ne.s32.totalorder %s151, %s152
      %p164 = scmp.eq.s32.totalorder %s37, 1
      %p165 = por %p163, %p164
      %p167 = scmp.ne.s32.totalorder %s152, %s166
      %p168 = scmp.eq.s32.totalorder %s37, 0
      %p169 = por %p167, %p168
      %s171 = sadd.s32 %s170, 1
      %p174 = scmp.eq.s32.totalorder %s31, 1
      %p175 = scmp.ne.s32.totalorder %s170, %s172
      %p176 = scmp.eq.s32.totalorder %s31, 0
      %p177 = por %p175, %p176
      %p178 = scmp.ne.s32.totalorder %s170, %s172
      %p179 = scmp.eq.s32.totalorder %s36, 1
      %p180 = por %p178, %p179
      %p181 = scmp.ne.s32.totalorder %s172, %s173
      %p182 = scmp.eq.s32.totalorder %s36, 0
      %p183 = por %p181, %p182
      %p184 = scmp.ne.s32.totalorder %s172, %s173
      %p185 = scmp.eq.s32.totalorder %s37, 1
      %p186 = por %p184, %p185
      %p188 = scmp.ne.s32.totalorder %s173, %s187
      %p189 = scmp.eq.s32.totalorder %s37, 0
      %p190 = por %p188, %p189
      %s192 = sadd.s32 %s191, 1
      %p195 = scmp.eq.s32.totalorder %s31, 1
      %p196 = scmp.ne.s32.totalorder %s191, %s193
      %p197 = scmp.eq.s32.totalorder %s31, 0
      %p198 = por %p196, %p197
      %p199 = scmp.ne.s32.totalorder %s191, %s193
      %p200 = scmp.eq.s32.totalorder %s36, 1
      %p201 = por %p199, %p200
      %p202 = scmp.ne.s32.totalorder %s193, %s194
      %p203 = scmp.eq.s32.totalorder %s36, 0
      %p204 = por %p202, %p203
      %p205 = scmp.ne.s32.totalorder %s193, %s194
      %p206 = scmp.eq.s32.totalorder %s37, 1
      %p207 = por %p205, %p206
      %p209 = scmp.ne.s32.totalorder %s194, %s208
      %p210 = scmp.eq.s32.totalorder %s37, 0
      %p211 = por %p209, %p210
      %s213 = sadd.s32 %s212, 1
      %p216 = scmp.eq.s32.totalorder %s31, 1
      %p217 = scmp.ne.s32.totalorder %s212, %s214
      %p218 = scmp.eq.s32.totalorder %s31, 0
      %p219 = por %p217, %p218
      %p220 = scmp.ne.s32.totalorder %s212, %s214
      %p221 = scmp.eq.s32.totalorder %s36, 1
      %p222 = por %p220, %p221
      %p223 = scmp.ne.s32.totalorder %s214, %s215
      %p224 = scmp.eq.s32.totalorder %s36, 0
      %p225 = por %p223, %p224
      %p226 = scmp.ne.s32.totalorder %s214, %s215
      %p227 = scmp.eq.s32.totalorder %s37, 1
      %p228 = por %p226, %p227
      %p230 = scmp.ne.s32.totalorder %s215, %s229
      %p231 = scmp.eq.s32.totalorder %s37, 0
      %p232 = por %p230, %p231
      %s234 = sadd.s32 %s233, 1
      %p237 = scmp.eq.s32.totalorder %s31, 1
      %p238 = scmp.ne.s32.totalorder %s233, %s235
      %p239 = scmp.eq.s32.totalorder %s31, 0
      %p240 = por %p238, %p239
      %p241 = scmp.ne.s32.totalorder %s233, %s235
      %p242 = scmp.eq.s32.totalorder %s36, 1
      %p243 = por %p241, %p242
      %p244 = scmp.ne.s32.totalorder %s235, %s236
      %p245 = scmp.eq.s32.totalorder %s36, 0
      %p246 = por %p244, %p245
      %p247 = scmp.ne.s32.totalorder %s235, %s236
      %p248 = scmp.eq.s32.totalorder %s37, 1
      %p249 = por %p247, %p248
      %p251 = scmp.ne.s32.totalorder %s236, %s250
      %p252 = scmp.eq.s32.totalorder %s37, 0
      %p253 = por %p251, %p252
      %s254 = ssub.s32 %s31, %s38
      %p255 = scmp.eq.s32.totalorder %s254, 0
      %s257 = sadd.s32 %s256, 1
      %s258 = scalar_select %p255, %s256, %s257
      %p261 = pneg %p255
      %p262 = scmp.eq.s32.totalorder %s31, 1
      %p263 = por %p261, %p262
      %p264 = scmp.ne.s32.totalorder %s256, %s259
      %p265 = scmp.eq.s32.totalorder %s31, 0
      %p266 = por %p264, %p265
      %p267 = scmp.ne.s32.totalorder %s256, %s259
      %p268 = scmp.eq.s32.totalorder %s36, 1
      %p269 = por %p267, %p268
      %p270 = scmp.ne.s32.totalorder %s259, %s260
      %p271 = scmp.eq.s32.totalorder %s36, 0
      %p272 = por %p270, %p271
      %p273 = scmp.ne.s32.totalorder %s259, %s260
      %p274 = scmp.eq.s32.totalorder %s37, 1
      %p275 = por %p273, %p274
      %p277 = scmp.ne.s32.totalorder %s260, %s276
      %p278 = scmp.eq.s32.totalorder %s37, 0
      %p279 = por %p277, %p278
      %s280 = ssub.s32 %s31, %s38
      %p281 = scmp.eq.s32.totalorder %s280, 0
      %s283 = sadd.s32 %s282, 1
      %s284 = scalar_select %p281, %s282, %s283
      %p287 = pneg %p281
      %p288 = scmp.eq.s32.totalorder %s31, 1
      %p289 = por %p287, %p288
      %p290 = scmp.ne.s32.totalorder %s282, %s285
      %p291 = scmp.eq.s32.totalorder %s31, 0
      %p292 = por %p290, %p291
      %p293 = scmp.ne.s32.totalorder %s282, %s285
      %p294 = scmp.eq.s32.totalorder %s36, 1
      %p295 = por %p293, %p294
      %p296 = scmp.ne.s32.totalorder %s285, %s286
      %p297 = scmp.eq.s32.totalorder %s36, 0
      %p298 = por %p296, %p297
      %p299 = scmp.ne.s32.totalorder %s285, %s286
      %p300 = scmp.eq.s32.totalorder %s37, 1
      %p301 = por %p299, %p300
      %p303 = scmp.ne.s32.totalorder %s286, %s302
      %p304 = scmp.eq.s32.totalorder %s37, 0
      %p305 = por %p303, %p304
      %s306 = ssub.s32 %s31, %s38
      %p307 = scmp.eq.s32.totalorder %s306, 0
      %s309 = sadd.s32 %s308, 1
      %s310 = scalar_select %p307, %s308, %s309
      %p313 = pneg %p307
      %p314 = scmp.eq.s32.totalorder %s31, 1
      %p315 = por %p313, %p314
      %p316 = scmp.ne.s32.totalorder %s308, %s311
      %p317 = scmp.eq.s32.totalorder %s31, 0
      %p318 = por %p316, %p317
      %p319 = scmp.ne.s32.totalorder %s308, %s311
      %p320 = scmp.eq.s32.totalorder %s36, 1
      %p321 = por %p319, %p320
      %p322 = scmp.ne.s32.totalorder %s311, %s312
      %p323 = scmp.eq.s32.totalorder %s36, 0
      %p324 = por %p322, %p323
      %p325 = scmp.ne.s32.totalorder %s311, %s312
      %p326 = scmp.eq.s32.totalorder %s37, 1
      %p327 = por %p325, %p326
      %p329 = scmp.ne.s32.totalorder %s312, %s328
      %p330 = scmp.eq.s32.totalorder %s37, 0
      %p331 = por %p329, %p330
      %p332 = scmp.le.s32.totalorder 1, %s31
      %p333 = scmp.lt.s32.totalorder %s31, 3
      %p334 = pnand %p332, %p333
      %p335 = pneg %p334
      // Predicated region
      $region9: #{tpu_custom_call.1} parent=5 // pred_check
        _
      $region10: #{tpu_custom_call.1} parent=5 // pred_check_branch
        %337 = sbr.rel (%p334) target = $region12
      $region11: #{tpu_custom_call.1} parent=5 // pred_region
        %s338 = ssub.s32 %s31, 1
        // Predicated region
        $region13: #{tpu_custom_call.1} parent=11 // pred_check
          %p339 = pneg %p78
        $region14: #{tpu_custom_call.1} parent=11 // pred_check_branch
          %341 = sbr.rel (%p339) target = $region16
        $region15: #{tpu_custom_call.1} parent=11 // pred_region
          %343 = vsyncadd [#allocation6], 0
          %s344 = sshll.u32 %s1, 4
          %s345 = int_to_ptr.hbm [resolvable:$true] %s344
          %s346 = sshll.u32 [#allocation5], 4
          %s347 = int_to_ptr.vmem [resolvable:$true] %s346
          %352 = dma.hbm_to_vmem [thread:$0]  %s345, 2048, %s347, [#allocation6], 64, 64, 4
        $region16: #{tpu_custom_call.1} parent=11 // pred_fallthru
          _
        // Predicated region
        $region17: #{tpu_custom_call.1} parent=11 // pred_check
          %p353 = pneg %p99
        $region18: #{tpu_custom_call.1} parent=11 // pred_check_branch
          %355 = sbr.rel (%p353) target = $region20
        $region19: #{tpu_custom_call.1} parent=11 // pred_region
          _
        $region20: #{tpu_custom_call.1} parent=11 // pred_fallthru
          _
        // Predicated region
        $region21: #{tpu_custom_call.1} parent=11 // pred_check
          %p356 = pneg %p120
        $region22: #{tpu_custom_call.1} parent=11 // pred_check_branch
          %358 = sbr.rel (%p356) target = $region24
        $region23: #{tpu_custom_call.1} parent=11 // pred_region
          %360 = vsyncadd [#allocation6], 0
          %s361 = sshll.u32 %s3, 4
          %s362 = int_to_ptr.hbm [resolvable:$true] %s361
          %s363 = sshll.u32 [#allocation7], 4
          %s364 = int_to_ptr.vmem [resolvable:$true] %s363
          %369 = dma.hbm_to_vmem [thread:$0]  %s362, 1024, %s364, [#allocation6], 64, 64, 4
        $region24: #{tpu_custom_call.1} parent=11 // pred_fallthru
          _
        // Predicated region
        $region25: #{tpu_custom_call.1} parent=11 // pred_check
          %p370 = pneg %p141
        $region26: #{tpu_custom_call.1} parent=11 // pred_check_branch
          %372 = sbr.rel (%p370) target = $region28
        $region27: #{tpu_custom_call.1} parent=11 // pred_region
          %374 = vsyncadd [#allocation9], 0
          %s376 = sshll.u32 %s4, 4
          %s377 = int_to_ptr.hbm [resolvable:$true] %s376
          %s378 = sshll.u32 [#allocation8], 4
          %s379 = int_to_ptr.vmem [resolvable:$true] %s378
          %381 = dma.hbm_to_vmem [thread:$0]  %s377, 16, %s379, [#allocation9]
        $region28: #{tpu_custom_call.1} parent=11 // pred_fallthru
          _
        // Predicated region
        $region29: #{tpu_custom_call.1} parent=11 // pred_check
          %p382 = pneg %p162
        $region30: #{tpu_custom_call.1} parent=11 // pred_check_branch
          %384 = sbr.rel (%p382) target = $region32
        $region31: #{tpu_custom_call.1} parent=11 // pred_region
          %386 = vsyncadd [#allocation9], 0
          %s387 = sshll.u32 %s5, 4
          %s388 = int_to_ptr.hbm [resolvable:$true] %s387
          %s389 = sshll.u32 [#allocation10], 4
          %s390 = int_to_ptr.vmem [resolvable:$true] %s389
          %395 = dma.hbm_to_vmem [thread:$0]  %s388, 1024, %s390, [#allocation9], 64, 64, 4
        $region32: #{tpu_custom_call.1} parent=11 // pred_fallthru
          _
        // Predicated region
        $region33: #{tpu_custom_call.1} parent=11 // pred_check
          %p396 = pneg %p183
        $region34: #{tpu_custom_call.1} parent=11 // pred_check_branch
          %398 = sbr.rel (%p396) target = $region36
        $region35: #{tpu_custom_call.1} parent=11 // pred_region
          _
        $region36: #{tpu_custom_call.1} parent=11 // pred_fallthru
          _
        // Predicated region
        $region37: #{tpu_custom_call.1} parent=11 // pred_check
          %p399 = pneg %p204
        $region38: #{tpu_custom_call.1} parent=11 // pred_check_branch
          %401 = sbr.rel (%p399) target = $region40
        $region39: #{tpu_custom_call.1} parent=11 // pred_region
          %403 = vsyncadd [#allocation12], 0
          %s404 = sshll.u32 %s7, 4
          %s405 = int_to_ptr.hbm [resolvable:$true] %s404
          %s406 = sshll.u32 [#allocation11], 4
          %s407 = int_to_ptr.vmem [resolvable:$true] %s406
          %412 = dma.hbm_to_vmem [thread:$0]  %s405, 2048, %s407, [#allocation12], 128, 128, 8
        $region40: #{tpu_custom_call.1} parent=11 // pred_fallthru
          _
        // Predicated region
        $region41: #{tpu_custom_call.1} parent=11 // pred_check
          %p413 = pneg %p225
        $region42: #{tpu_custom_call.1} parent=11 // pred_check_branch
          %415 = sbr.rel (%p413) target = $region44
        $region43: #{tpu_custom_call.1} parent=11 // pred_region
          _
        $region44: #{tpu_custom_call.1} parent=11 // pred_fallthru
          _
        // Predicated region
        $region45: #{tpu_custom_call.1} parent=11 // pred_check
          %p416 = pneg %p246
        $region46: #{tpu_custom_call.1} parent=11 // pred_check_branch
          %418 = sbr.rel (%p416) target = $region48
        $region47: #{tpu_custom_call.1} parent=11 // pred_region
          %420 = vsyncadd [#allocation12], 0
          %s421 = sshll.u32 %s9, 4
          %s422 = int_to_ptr.hbm [resolvable:$true] %s421
          %s423 = sshll.u32 [#allocation13], 4
          %s424 = int_to_ptr.vmem [resolvable:$true] %s423
          %429 = dma.hbm_to_vmem [thread:$0]  %s422, 2048, %s424, [#allocation12], 64, 64, 4
        $region48: #{tpu_custom_call.1} parent=11 // pred_fallthru
          _
      $region12: #{tpu_custom_call.1} parent=5 // pred_fallthru
        _
      %p430 = scmp.lt.s32.totalorder %s31, 2
      // Predicated region
      $region49: #{tpu_custom_call.1} parent=5 // pred_check
        %p431 = pneg %p430
      $region50: #{tpu_custom_call.1} parent=5 // pred_check_branch
        %433 = sbr.rel (%p431) target = $region52
      $region51: #{tpu_custom_call.1} parent=5 // pred_region
        // Predicated region
        $region53: #{tpu_custom_call.1} parent=51 // pred_check
          %p434 = pneg %p51
        $region54: #{tpu_custom_call.1} parent=51 // pred_check_branch
          %436 = sbr.rel (%p434) target = $region56
        $region55: #{tpu_custom_call.1} parent=51 // pred_region
          %s437 = sand.u32 %s41, 1
          %s438 = scalar_lea.sflag [#allocation3], %s437
          %s439 = sand.u32 %s41, 1
          %s440 = smul.addr %s439, 256
          %s441 = scalar_lea.vmem [#allocation2], %s440
          %s442 = smul.u32 16, %s31
          %444 = vsyncadd %s438, 0
          %s445 = smul.addr %s442, 2
          %s446 = smul.addr %s445, 8
          %s447 = scalar_lea.hbm %s0, %s446
          %s448 = sshll.u32 %s447, 4
          %s449 = int_to_ptr.hbm [resolvable:$true] %s448
          %s450 = sshll.u32 %s441, 4
          %s451 = int_to_ptr.vmem [resolvable:$true] %s450
          %456 = dma.hbm_to_vmem [thread:$0]  %s449, 4096, %s451, %s438, 256, 256, 16
        $region56: #{tpu_custom_call.1} parent=51 // pred_fallthru
          _
      $region52: #{tpu_custom_call.1} parent=5 // pred_fallthru
        _
      %p457 = scmp.le.s32.totalorder 1, %s31
      %p458 = scmp.lt.s32.totalorder %s31, 3
      %p459 = pnand %p457, %p458
      %p460 = pneg %p459
      // Predicated region
      $region57: #{tpu_custom_call.1} parent=5 // pred_check
        _
      $region58: #{tpu_custom_call.1} parent=5 // pred_check_branch
        %462 = sbr.rel (%p459) target = $region60
      $region59: #{tpu_custom_call.1} parent=5 // pred_region
        %s463 = ssub.s32 %s31, 1
        %s464 = sand.u32 %s44, 1
        %s465 = scalar_lea.sflag [#allocation3], %s464
        %s466 = sand.u32 %s44, 1
        %s467 = smul.addr %s466, 256
        %s468 = scalar_lea.vmem [#allocation2], %s467
        // Predicated region
        $region61: #{tpu_custom_call.1} parent=59 // pred_check
          %p469 = pneg %p57
        $region62: #{tpu_custom_call.1} parent=59 // pred_check_branch
          %471 = sbr.rel (%p469) target = $region64
        $region63: #{tpu_custom_call.1} parent=59 // pred_region
          %473 = dma.done %s465, 4096
        $region64: #{tpu_custom_call.1} parent=59 // pred_fallthru
          _
        // Predicated region
        $region65: #{tpu_custom_call.1} parent=59 // pred_check
          %p474 = pneg %p78
        $region66: #{tpu_custom_call.1} parent=59 // pred_check_branch
          %476 = sbr.rel (%p474) target = $region68
        $region67: #{tpu_custom_call.1} parent=59 // pred_region
          %478 = dma.done [#allocation6], 2048
        $region68: #{tpu_custom_call.1} parent=59 // pred_fallthru
          _
        // Predicated region
        $region69: #{tpu_custom_call.1} parent=59 // pred_check
          %p479 = pneg %p120
        $region70: #{tpu_custom_call.1} parent=59 // pred_check_branch
          %481 = sbr.rel (%p479) target = $region72
        $region71: #{tpu_custom_call.1} parent=59 // pred_region
          %483 = dma.done [#allocation6], 1024
        $region72: #{tpu_custom_call.1} parent=59 // pred_fallthru
          _
        // Predicated region
        $region73: #{tpu_custom_call.1} parent=59 // pred_check
          %p484 = pneg %p141
        $region74: #{tpu_custom_call.1} parent=59 // pred_check_branch
          %486 = sbr.rel (%p484) target = $region76
        $region75: #{tpu_custom_call.1} parent=59 // pred_region
          %488 = dma.done [#allocation9], 16
        $region76: #{tpu_custom_call.1} parent=59 // pred_fallthru
          _
        // Predicated region
        $region77: #{tpu_custom_call.1} parent=59 // pred_check
          %p489 = pneg %p162
        $region78: #{tpu_custom_call.1} parent=59 // pred_check_branch
          %491 = sbr.rel (%p489) target = $region80
        $region79: #{tpu_custom_call.1} parent=59 // pred_region
          %493 = dma.done [#allocation9], 1024
        $region80: #{tpu_custom_call.1} parent=59 // pred_fallthru
          _
        // Predicated region
        $region81: #{tpu_custom_call.1} parent=59 // pred_check
          %p494 = pneg %p204
        $region82: #{tpu_custom_call.1} parent=59 // pred_check_branch
          %496 = sbr.rel (%p494) target = $region84
        $region83: #{tpu_custom_call.1} parent=59 // pred_region
          %498 = dma.done [#allocation12], 2048
        $region84: #{tpu_custom_call.1} parent=59 // pred_fallthru
          _
        // Predicated region
        $region85: #{tpu_custom_call.1} parent=59 // pred_check
          %p499 = pneg %p246
        $region86: #{tpu_custom_call.1} parent=59 // pred_check_branch
          %501 = sbr.rel (%p499) target = $region88
        $region87: #{tpu_custom_call.1} parent=59 // pred_region
          %503 = dma.done [#allocation12], 2048
        $region88: #{tpu_custom_call.1} parent=59 // pred_fallthru
          _
        %s504 = sand.u32 %s44, 1
        %s505 = scalar_lea.sflag [#allocation3], %s504
        %s506 = sand.u32 %s44, 1
        %s507 = smul.addr %s506, 256
        %s508 = scalar_lea.vmem [#allocation2], %s507
        %p509 = pneg %p57
        %p510 = pneg %p54
        %p511 = pneg %p78
        %p512 = pneg %p75
        %p513 = pneg %p99
        %p514 = pneg %p96
        %p515 = pneg %p120
        %p516 = pneg %p117
        %p517 = pneg %p141
        %p518 = pneg %p138
        %p519 = pneg %p162
        %p520 = pneg %p159
        %p521 = pneg %p183
        %p522 = pneg %p180
        %p523 = pneg %p204
        %p524 = pneg %p201
        %p525 = pneg %p225
        %p526 = pneg %p222
        %p527 = pneg %p246
        %p528 = pneg %p243
        %p529 = pneg %p272
        %p530 = pneg %p269
        %s531 = sand.u32 %s259, 1
        %s532 = scalar_lea.sflag [#allocation4], %s531
        %s533 = sand.u32 %s259, 1
        %s534 = smul.addr %s533, 256
        %s535 = scalar_lea.vmem [#allocation14], %s534
        %p536 = pneg %p298
        %p537 = pneg %p295
        %s538 = sand.u32 %s36, 1
        %s539 = scalar_lea.sflag [#allocation16], %s538
        %s540 = sand.u32 %s285, 1
        %s541 = smul.addr %s540, 128
        %s542 = scalar_lea.vmem [#allocation15], %s541
        %p543 = pneg %p324
        %p544 = pneg %p321
        %s545 = sand.u32 %s36, 1
        %s546 = scalar_lea.sflag [#allocation16], %s545
        %s547 = sand.u32 %s311, 1
        %s548 = smul.addr %s547, 64
        %s549 = scalar_lea.vmem [#allocation17], %s548
        %s550 = smul.u32 16, %s36
        %s551 = smul.u32 16, %s36
        %s552 = smul.u32 16, %s36
        %s553 = smul.u32 16, %s36
        %v554 = vld [vmem:[%s468] sm:$0xff]
        %v555 = vld [vmem:[%s468 + $0x8] sm:$0xff]
        %v556 = vld [vmem:[%s468 + $0x10] sm:$0xff]
        %v557 = vld [vmem:[%s468 + $0x18] sm:$0xff]
        %v558 = vld [vmem:[%s468 + $0x20] sm:$0xff]
        %v559 = vld [vmem:[%s468 + $0x28] sm:$0xff]
        %v560 = vld [vmem:[%s468 + $0x30] sm:$0xff]
        %v561 = vld [vmem:[%s468 + $0x38] sm:$0xff]
        %v562 = vld [vmem:[%s468 + $0x40] sm:$0xff]
        %v563 = vld [vmem:[%s468 + $0x48] sm:$0xff]
        %v564 = vld [vmem:[%s468 + $0x50] sm:$0xff]
        %v565 = vld [vmem:[%s468 + $0x58] sm:$0xff]
        %v566 = vld [vmem:[%s468 + $0x60] sm:$0xff]
        %v567 = vld [vmem:[%s468 + $0x68] sm:$0xff]
        %v568 = vld [vmem:[%s468 + $0x70] sm:$0xff]
        %v569 = vld [vmem:[%s468 + $0x78] sm:$0xff]
        %v570 = vld [vmem:[%s468 + $0x80] sm:$0xff]
        %v571 = vld [vmem:[%s468 + $0x88] sm:$0xff]
        %v572 = vld [vmem:[%s468 + $0x90] sm:$0xff]
        %v573 = vld [vmem:[%s468 + $0x98] sm:$0xff]
        %v574 = vld [vmem:[%s468 + $0xa0] sm:$0xff]
        %v575 = vld [vmem:[%s468 + $0xa8] sm:$0xff]
        %v576 = vld [vmem:[%s468 + $0xb0] sm:$0xff]
        %v577 = vld [vmem:[%s468 + $0xb8] sm:$0xff]
        %v578 = vld [vmem:[%s468 + $0xc0] sm:$0xff]
        %v579 = vld [vmem:[%s468 + $0xc8] sm:$0xff]
        %v580 = vld [vmem:[%s468 + $0xd0] sm:$0xff]
        %v581 = vld [vmem:[%s468 + $0xd8] sm:$0xff]
        %v582 = vld [vmem:[%s468 + $0xe0] sm:$0xff]
        %v583 = vld [vmem:[%s468 + $0xe8] sm:$0xff]
        %v584 = vld [vmem:[%s468 + $0xf0] sm:$0xff]
        %v585 = vld [vmem:[%s468 + $0xf8] sm:$0xff]
        %v586 = vpack.c.bf16 %v556, %v554
        %v587 = vpack.c.bf16 %v557, %v555
        %v588 = vpack.c.bf16 %v560, %v558
        %v589 = vpack.c.bf16 %v561, %v559
        %v590 = vpack.c.bf16 %v564, %v562
        %v591 = vpack.c.bf16 %v565, %v563
        %v592 = vpack.c.bf16 %v568, %v566
        %v593 = vpack.c.bf16 %v569, %v567
        %v594 = vpack.c.bf16 %v572, %v570
        %v595 = vpack.c.bf16 %v573, %v571
        %v596 = vpack.c.bf16 %v576, %v574
        %v597 = vpack.c.bf16 %v577, %v575
        %v598 = vpack.c.bf16 %v580, %v578
        %v599 = vpack.c.bf16 %v581, %v579
        %v600 = vpack.c.bf16 %v584, %v582
        %v601 = vpack.c.bf16 %v585, %v583
        %v602 = vld [vmem:[#allocation5] sm:$0xf]
        %v603 = vld [vmem:[#allocation5 + $0x4] sm:$0xf]
        %v604 = vld [vmem:[#allocation5 + $0x8] sm:$0xf]
        %v605 = vld [vmem:[#allocation5 + $0xc] sm:$0xf]
        %v606 = vld [vmem:[#allocation5 + $0x10] sm:$0xf]
        %v607 = vld [vmem:[#allocation5 + $0x14] sm:$0xf]
        %v608 = vld [vmem:[#allocation5 + $0x18] sm:$0xf]
        %v609 = vld [vmem:[#allocation5 + $0x1c] sm:$0xf]
        %v610 = vld [vmem:[#allocation5 + $0x20] sm:$0xf]
        %v611 = vld [vmem:[#allocation5 + $0x24] sm:$0xf]
        %v612 = vld [vmem:[#allocation5 + $0x28] sm:$0xf]
        %v613 = vld [vmem:[#allocation5 + $0x2c] sm:$0xf]
        %v614 = vld [vmem:[#allocation5 + $0x30] sm:$0xf]
        %v615 = vld [vmem:[#allocation5 + $0x34] sm:$0xf]
        %v616 = vld [vmem:[#allocation5 + $0x38] sm:$0xf]
        %v617 = vld [vmem:[#allocation5 + $0x3c] sm:$0xf]
        %v618 = vld [vmem:[#allocation5 + $0x40] sm:$0xf]
        %v619 = vld [vmem:[#allocation5 + $0x44] sm:$0xf]
        %v620 = vld [vmem:[#allocation5 + $0x48] sm:$0xf]
        %v621 = vld [vmem:[#allocation5 + $0x4c] sm:$0xf]
        %v622 = vld [vmem:[#allocation5 + $0x50] sm:$0xf]
        %v623 = vld [vmem:[#allocation5 + $0x54] sm:$0xf]
        %v624 = vld [vmem:[#allocation5 + $0x58] sm:$0xf]
        %v625 = vld [vmem:[#allocation5 + $0x5c] sm:$0xf]
        %v626 = vld [vmem:[#allocation5 + $0x60] sm:$0xf]
        %v627 = vld [vmem:[#allocation5 + $0x64] sm:$0xf]
        %v628 = vld [vmem:[#allocation5 + $0x68] sm:$0xf]
        %v629 = vld [vmem:[#allocation5 + $0x6c] sm:$0xf]
        %v630 = vld [vmem:[#allocation5 + $0x70] sm:$0xf]
        %v631 = vld [vmem:[#allocation5 + $0x74] sm:$0xf]
        %v632 = vld [vmem:[#allocation5 + $0x78] sm:$0xf]
        %v633 = vld [vmem:[#allocation5 + $0x7c] sm:$0xf]
        %v634 = vld [vmem:[%s2] sm:$0x1]
        %v636 = vperm.slane %v634, 0
        %v670 = vunpack.c.l.b16 %v602
        %v671 = vunpack.c.l.b16 %v603
        %v672 = vunpack.c.l.b16 %v604
        %v673 = vunpack.c.l.b16 %v605
        %v674 = vunpack.c.l.b16 %v606
        %v675 = vunpack.c.l.b16 %v607
        %v676 = vunpack.c.l.b16 %v608
        %v677 = vunpack.c.l.b16 %v609
        %v678 = vunpack.c.l.b16 %v610
        %v679 = vunpack.c.l.b16 %v611
        %v680 = vunpack.c.l.b16 %v612
        %v681 = vunpack.c.l.b16 %v613
        %v682 = vunpack.c.l.b16 %v614
        %v683 = vunpack.c.l.b16 %v615
        %v684 = vunpack.c.l.b16 %v616
        %v685 = vunpack.c.l.b16 %v617
        %v686 = vunpack.c.l.b16 %v618
        %v687 = vunpack.c.l.b16 %v619
        %v688 = vunpack.c.l.b16 %v620
        %v689 = vunpack.c.l.b16 %v621
        %v690 = vunpack.c.l.b16 %v622
        %v691 = vunpack.c.l.b16 %v623
        %v692 = vunpack.c.l.b16 %v624
        %v693 = vunpack.c.l.b16 %v625
        %v694 = vunpack.c.l.b16 %v626
        %v695 = vunpack.c.l.b16 %v627
        %v696 = vunpack.c.l.b16 %v628
        %v697 = vunpack.c.l.b16 %v629
        %v698 = vunpack.c.l.b16 %v630
        %v699 = vunpack.c.l.b16 %v631
        %v700 = vunpack.c.l.b16 %v632
        %v701 = vunpack.c.l.b16 %v633
        %v702 = vpack.c.b16 %v671, %v670
        %v703 = vpack.c.b16 %v673, %v672
        %v704 = vpack.c.b16 %v675, %v674
        %v705 = vpack.c.b16 %v677, %v676
        %v706 = vpack.c.b16 %v679, %v678
        %v707 = vpack.c.b16 %v681, %v680
        %v708 = vpack.c.b16 %v683, %v682
        %v709 = vpack.c.b16 %v685, %v684
        %v710 = vpack.c.b16 %v687, %v686
        %v711 = vpack.c.b16 %v689, %v688
        %v712 = vpack.c.b16 %v691, %v690
        %v713 = vpack.c.b16 %v693, %v692
        %v714 = vpack.c.b16 %v695, %v694
        %v715 = vpack.c.b16 %v697, %v696
        %v716 = vpack.c.b16 %v699, %v698
        %v717 = vpack.c.b16 %v701, %v700
        %734 = vmatpush.bf16.msra.mxu0 %v709
        %735 = vmatpush.bf16.msra.mxu0 %v708
        %736 = vmatpush.bf16.msra.mxu0 %v707
        %737 = vmatpush.bf16.msra.mxu0 %v706
        %738 = vmatpush.bf16.msra.mxu0 %v705
        %739 = vmatpush.bf16.msra.mxu0 %v704
        %740 = vmatpush.bf16.msra.mxu0 %v703
        %741 = vmatpush.bf16.msra.mxu0 %v702
        %742 = vmatmul.bf16.gmra.mxu0 %v586
        %v743 = vpop.f32.mrf.mxu0
        %v744 = vadd.f32 %v636, %v743
        %v745 = vpop.f32.mrf.mxu0
        %v746 = vadd.f32 %v636, %v745
        %747 = vmatmul.bf16.gmra.mxu0 %v588
        %v748 = vpop.f32.mrf.mxu0
        %v749 = vadd.f32 %v636, %v748
        %v750 = vpop.f32.mrf.mxu0
        %v751 = vadd.f32 %v636, %v750
        %752 = vmatmul.bf16.gmra.mxu0 %v590
        %v753 = vpop.f32.mrf.mxu0
        %v754 = vadd.f32 %v636, %v753
        %v755 = vpop.f32.mrf.mxu0
        %v756 = vadd.f32 %v636, %v755
        %757 = vmatmul.bf16.gmra.mxu0 %v592
        %v758 = vpop.f32.mrf.mxu0
        %v759 = vadd.f32 %v636, %v758
        %v760 = vpop.f32.mrf.mxu0
        %v761 = vadd.f32 %v636, %v760
        %762 = vmatmul.bf16.gmra.mxu0 %v594
        %v763 = vpop.f32.mrf.mxu0
        %v764 = vadd.f32 %v636, %v763
        %v765 = vpop.f32.mrf.mxu0
        %v766 = vadd.f32 %v636, %v765
        %767 = vmatmul.bf16.gmra.mxu0 %v596
        %v768 = vpop.f32.mrf.mxu0
        %v769 = vadd.f32 %v636, %v768
        %v770 = vpop.f32.mrf.mxu0
        %v771 = vadd.f32 %v636, %v770
        %772 = vmatmul.bf16.gmra.mxu0 %v598
        %v773 = vpop.f32.mrf.mxu0
        %v774 = vadd.f32 %v636, %v773
        %v775 = vpop.f32.mrf.mxu0
        %v776 = vadd.f32 %v636, %v775
        %777 = vmatmul.bf16.gmra.mxu0 %v600
        %v778 = vpop.f32.mrf.mxu0
        %v779 = vadd.f32 %v636, %v778
        %v780 = vpop.f32.mrf.mxu0
        %v781 = vadd.f32 %v636, %v780
        %782 = vdwg.mxu0
        %783 = vmatpush.bf16.msra.mxu0 %v717
        %784 = vmatpush.bf16.msra.mxu0 %v716
        %785 = vmatpush.bf16.msra.mxu0 %v715
        %786 = vmatpush.bf16.msra.mxu0 %v714
        %787 = vmatpush.bf16.msra.mxu0 %v713
        %788 = vmatpush.bf16.msra.mxu0 %v712
        %789 = vmatpush.bf16.msra.mxu0 %v711
        %790 = vmatpush.bf16.msra.mxu0 %v710
        %791 = vmatmul.bf16.gmra.mxu0 %v587
        %v792 = vpop.f32.mrf.mxu0
        %v793 = vadd.f32 %v744, %v792
        %v794 = vpop.f32.mrf.mxu0
        %v795 = vadd.f32 %v746, %v794
        %796 = vmatmul.bf16.gmra.mxu0 %v589
        %v797 = vpop.f32.mrf.mxu0
        %v798 = vadd.f32 %v749, %v797
        %v799 = vpop.f32.mrf.mxu0
        %v800 = vadd.f32 %v751, %v799
        %801 = vmatmul.bf16.gmra.mxu0 %v591
        %v802 = vpop.f32.mrf.mxu0
        %v803 = vadd.f32 %v754, %v802
        %v804 = vpop.f32.mrf.mxu0
        %v805 = vadd.f32 %v756, %v804
        %806 = vmatmul.bf16.gmra.mxu0 %v593
        %v807 = vpop.f32.mrf.mxu0
        %v808 = vadd.f32 %v759, %v807
        %v809 = vpop.f32.mrf.mxu0
        %v810 = vadd.f32 %v761, %v809
        %811 = vmatmul.bf16.gmra.mxu0 %v595
        %v812 = vpop.f32.mrf.mxu0
        %v813 = vadd.f32 %v764, %v812
        %v814 = vpop.f32.mrf.mxu0
        %v815 = vadd.f32 %v766, %v814
        %816 = vmatmul.bf16.gmra.mxu0 %v597
        %v817 = vpop.f32.mrf.mxu0
        %v818 = vadd.f32 %v769, %v817
        %v819 = vpop.f32.mrf.mxu0
        %v820 = vadd.f32 %v771, %v819
        %821 = vmatmul.bf16.gmra.mxu0 %v599
        %v822 = vpop.f32.mrf.mxu0
        %v823 = vadd.f32 %v774, %v822
        %v824 = vpop.f32.mrf.mxu0
        %v825 = vadd.f32 %v776, %v824
        %826 = vmatmul.bf16.gmra.mxu0 %v601
        %v827 = vpop.f32.mrf.mxu0
        %v828 = vadd.f32 %v779, %v827
        %v829 = vpop.f32.mrf.mxu0
        %v830 = vadd.f32 %v781, %v829
        %831 = vdwg.mxu0
        %v832 = vmax.f32 %v793, 0.0
        %v833 = vmax.f32 %v795, 0.0
        %v834 = vmax.f32 %v798, 0.0
        %v835 = vmax.f32 %v800, 0.0
        %v836 = vmax.f32 %v803, 0.0
        %v837 = vmax.f32 %v805, 0.0
        %v838 = vmax.f32 %v808, 0.0
        %v839 = vmax.f32 %v810, 0.0
        %v840 = vmax.f32 %v813, 0.0
        %v841 = vmax.f32 %v815, 0.0
        %v842 = vmax.f32 %v818, 0.0
        %v843 = vmax.f32 %v820, 0.0
        %v844 = vmax.f32 %v823, 0.0
        %v845 = vmax.f32 %v825, 0.0
        %v846 = vmax.f32 %v828, 0.0
        %v847 = vmax.f32 %v830, 0.0
        %v848 = vld [vmem:[#allocation7] sm:$0xf]
        %v849 = vld [vmem:[#allocation7 + $0x4] sm:$0xf]
        %v850 = vld [vmem:[#allocation7 + $0x8] sm:$0xf]
        %v851 = vld [vmem:[#allocation7 + $0xc] sm:$0xf]
        %v852 = vld [vmem:[#allocation7 + $0x10] sm:$0xf]
        %v853 = vld [vmem:[#allocation7 + $0x14] sm:$0xf]
        %v854 = vld [vmem:[#allocation7 + $0x18] sm:$0xf]
        %v855 = vld [vmem:[#allocation7 + $0x1c] sm:$0xf]
        %v856 = vld [vmem:[#allocation7 + $0x20] sm:$0xf]
        %v857 = vld [vmem:[#allocation7 + $0x24] sm:$0xf]
        %v858 = vld [vmem:[#allocation7 + $0x28] sm:$0xf]
        %v859 = vld [vmem:[#allocation7 + $0x2c] sm:$0xf]
        %v860 = vld [vmem:[#allocation7 + $0x30] sm:$0xf]
        %v861 = vld [vmem:[#allocation7 + $0x34] sm:$0xf]
        %v862 = vld [vmem:[#allocation7 + $0x38] sm:$0xf]
        %v863 = vld [vmem:[#allocation7 + $0x3c] sm:$0xf]
        %v864 = vpack.c.bf16 %v833, %v832
        %v865 = vpack.c.bf16 %v835, %v834
        %v866 = vpack.c.bf16 %v837, %v836
        %v867 = vpack.c.bf16 %v839, %v838
        %v868 = vpack.c.bf16 %v841, %v840
        %v869 = vpack.c.bf16 %v843, %v842
        %v870 = vpack.c.bf16 %v845, %v844
        %v871 = vpack.c.bf16 %v847, %v846
        %v872 = vld [vmem:[#allocation8] sm:$0x1]
        %v874 = vperm.slane %v872, 0
        %v892 = vunpack.c.l.b16 %v848
        %v893 = vunpack.c.l.b16 %v849
        %v894 = vunpack.c.l.b16 %v850
        %v895 = vunpack.c.l.b16 %v851
        %v896 = vunpack.c.l.b16 %v852
        %v897 = vunpack.c.l.b16 %v853
        %v898 = vunpack.c.l.b16 %v854
        %v899 = vunpack.c.l.b16 %v855
        %v900 = vunpack.c.l.b16 %v856
        %v901 = vunpack.c.l.b16 %v857
        %v902 = vunpack.c.l.b16 %v858
        %v903 = vunpack.c.l.b16 %v859
        %v904 = vunpack.c.l.b16 %v860
        %v905 = vunpack.c.l.b16 %v861
        %v906 = vunpack.c.l.b16 %v862
        %v907 = vunpack.c.l.b16 %v863
        %v908 = vpack.c.b16 %v893, %v892
        %v909 = vpack.c.b16 %v895, %v894
        %v910 = vpack.c.b16 %v897, %v896
        %v911 = vpack.c.b16 %v899, %v898
        %v912 = vpack.c.b16 %v901, %v900
        %v913 = vpack.c.b16 %v903, %v902
        %v914 = vpack.c.b16 %v905, %v904
        %v915 = vpack.c.b16 %v907, %v906
        %924 = vmatpush.bf16.msra.mxu0 %v915
        %925 = vmatpush.bf16.msra.mxu0 %v914
        %926 = vmatpush.bf16.msra.mxu0 %v913
        %927 = vmatpush.bf16.msra.mxu0 %v912
        %928 = vmatpush.bf16.msra.mxu0 %v911
        %929 = vmatpush.bf16.msra.mxu0 %v910
        %930 = vmatpush.bf16.msra.mxu0 %v909
        %931 = vmatpush.bf16.msra.mxu0 %v908
        %932 = vmatmul.bf16.gmra.mxu0 %v864
        %v933 = vpop.f32.mrf.mxu0
        %v934 = vadd.f32 %v874, %v933
        %v935 = vpop.f32.mrf.mxu0
        %v936 = vadd.f32 %v874, %v935
        %937 = vmatmul.bf16.gmra.mxu0 %v865
        %v938 = vpop.f32.mrf.mxu0
        %v939 = vadd.f32 %v874, %v938
        %v940 = vpop.f32.mrf.mxu0
        %v941 = vadd.f32 %v874, %v940
        %942 = vmatmul.bf16.gmra.mxu0 %v866
        %v943 = vpop.f32.mrf.mxu0
        %v944 = vadd.f32 %v874, %v943
        %v945 = vpop.f32.mrf.mxu0
        %v946 = vadd.f32 %v874, %v945
        %947 = vmatmul.bf16.gmra.mxu0 %v867
        %v948 = vpop.f32.mrf.mxu0
        %v949 = vadd.f32 %v874, %v948
        %v950 = vpop.f32.mrf.mxu0
        %v951 = vadd.f32 %v874, %v950
        %952 = vmatmul.bf16.gmra.mxu0 %v868
        %v953 = vpop.f32.mrf.mxu0
        %v954 = vadd.f32 %v874, %v953
        %v955 = vpop.f32.mrf.mxu0
        %v956 = vadd.f32 %v874, %v955
        %957 = vmatmul.bf16.gmra.mxu0 %v869
        %v958 = vpop.f32.mrf.mxu0
        %v959 = vadd.f32 %v874, %v958
        %v960 = vpop.f32.mrf.mxu0
        %v961 = vadd.f32 %v874, %v960
        %962 = vmatmul.bf16.gmra.mxu0 %v870
        %v963 = vpop.f32.mrf.mxu0
        %v964 = vadd.f32 %v874, %v963
        %v965 = vpop.f32.mrf.mxu0
        %v966 = vadd.f32 %v874, %v965
        %967 = vmatmul.bf16.gmra.mxu0 %v871
        %v968 = vpop.f32.mrf.mxu0
        %v969 = vadd.f32 %v874, %v968
        %v970 = vpop.f32.mrf.mxu0
        %v971 = vadd.f32 %v874, %v970
        %972 = vdwg.mxu0
        %v973 = vld [vmem:[#allocation10] sm:$0xf]
        %v974 = vld [vmem:[#allocation10 + $0x4] sm:$0xf]
        %v975 = vld [vmem:[#allocation10 + $0x8] sm:$0xf]
        %v976 = vld [vmem:[#allocation10 + $0xc] sm:$0xf]
        %v977 = vld [vmem:[#allocation10 + $0x10] sm:$0xf]
        %v978 = vld [vmem:[#allocation10 + $0x14] sm:$0xf]
        %v979 = vld [vmem:[#allocation10 + $0x18] sm:$0xf]
        %v980 = vld [vmem:[#allocation10 + $0x1c] sm:$0xf]
        %v981 = vld [vmem:[#allocation10 + $0x20] sm:$0xf]
        %v982 = vld [vmem:[#allocation10 + $0x24] sm:$0xf]
        %v983 = vld [vmem:[#allocation10 + $0x28] sm:$0xf]
        %v984 = vld [vmem:[#allocation10 + $0x2c] sm:$0xf]
        %v985 = vld [vmem:[#allocation10 + $0x30] sm:$0xf]
        %v986 = vld [vmem:[#allocation10 + $0x34] sm:$0xf]
        %v987 = vld [vmem:[#allocation10 + $0x38] sm:$0xf]
        %v988 = vld [vmem:[#allocation10 + $0x3c] sm:$0xf]
        %v989 = vpack.c.bf16 %v936, %v934
        %v990 = vpack.c.bf16 %v941, %v939
        %v991 = vpack.c.bf16 %v946, %v944
        %v992 = vpack.c.bf16 %v951, %v949
        %v993 = vpack.c.bf16 %v956, %v954
        %v994 = vpack.c.bf16 %v961, %v959
        %v995 = vpack.c.bf16 %v966, %v964
        %v996 = vpack.c.bf16 %v971, %v969
        %v997 = vld [vmem:[%s6] sm:$0x1]
        %v999 = vperm.slane %v997, 0
        %v1017 = vunpack.c.l.b16 %v973
        %v1018 = vunpack.c.l.b16 %v974
        %v1019 = vunpack.c.l.b16 %v975
        %v1020 = vunpack.c.l.b16 %v976
        %v1021 = vunpack.c.l.b16 %v977
        %v1022 = vunpack.c.l.b16 %v978
        %v1023 = vunpack.c.l.b16 %v979
        %v1024 = vunpack.c.l.b16 %v980
        %v1025 = vunpack.c.l.b16 %v981
        %v1026 = vunpack.c.l.b16 %v982
        %v1027 = vunpack.c.l.b16 %v983
        %v1028 = vunpack.c.l.b16 %v984
        %v1029 = vunpack.c.l.b16 %v985
        %v1030 = vunpack.c.l.b16 %v986
        %v1031 = vunpack.c.l.b16 %v987
        %v1032 = vunpack.c.l.b16 %v988
        %v1033 = vpack.c.b16 %v1018, %v1017
        %v1034 = vpack.c.b16 %v1020, %v1019
        %v1035 = vpack.c.b16 %v1022, %v1021
        %v1036 = vpack.c.b16 %v1024, %v1023
        %v1037 = vpack.c.b16 %v1026, %v1025
        %v1038 = vpack.c.b16 %v1028, %v1027
        %v1039 = vpack.c.b16 %v1030, %v1029
        %v1040 = vpack.c.b16 %v1032, %v1031
        %1049 = vmatpush.bf16.msra.mxu0 %v1040
        %1050 = vmatpush.bf16.msra.mxu0 %v1039
        %1051 = vmatpush.bf16.msra.mxu0 %v1038
        %1052 = vmatpush.bf16.msra.mxu0 %v1037
        %1053 = vmatpush.bf16.msra.mxu0 %v1036
        %1054 = vmatpush.bf16.msra.mxu0 %v1035
        %1055 = vmatpush.bf16.msra.mxu0 %v1034
        %1056 = vmatpush.bf16.msra.mxu0 %v1033
        %1057 = vmatmul.bf16.gmra.mxu0 %v989
        %v1058 = vpop.f32.mrf.mxu0
        %v1059 = vadd.f32 %v999, %v1058
        %v1060 = vpop.f32.mrf.mxu0
        %v1061 = vadd.f32 %v999, %v1060
        %1062 = vmatmul.bf16.gmra.mxu0 %v990
        %v1063 = vpop.f32.mrf.mxu0
        %v1064 = vadd.f32 %v999, %v1063
        %v1065 = vpop.f32.mrf.mxu0
        %v1066 = vadd.f32 %v999, %v1065
        %1067 = vmatmul.bf16.gmra.mxu0 %v991
        %v1068 = vpop.f32.mrf.mxu0
        %v1069 = vadd.f32 %v999, %v1068
        %v1070 = vpop.f32.mrf.mxu0
        %v1071 = vadd.f32 %v999, %v1070
        %1072 = vmatmul.bf16.gmra.mxu0 %v992
        %v1073 = vpop.f32.mrf.mxu0
        %v1074 = vadd.f32 %v999, %v1073
        %v1075 = vpop.f32.mrf.mxu0
        %v1076 = vadd.f32 %v999, %v1075
        %1077 = vmatmul.bf16.gmra.mxu0 %v993
        %v1078 = vpop.f32.mrf.mxu0
        %v1079 = vadd.f32 %v999, %v1078
        %v1080 = vpop.f32.mrf.mxu0
        %v1081 = vadd.f32 %v999, %v1080
        %1082 = vmatmul.bf16.gmra.mxu0 %v994
        %v1083 = vpop.f32.mrf.mxu0
        %v1084 = vadd.f32 %v999, %v1083
        %v1085 = vpop.f32.mrf.mxu0
        %v1086 = vadd.f32 %v999, %v1085
        %1087 = vmatmul.bf16.gmra.mxu0 %v995
        %v1088 = vpop.f32.mrf.mxu0
        %v1089 = vadd.f32 %v999, %v1088
        %v1090 = vpop.f32.mrf.mxu0
        %v1091 = vadd.f32 %v999, %v1090
        %1092 = vmatmul.bf16.gmra.mxu0 %v996
        %v1093 = vpop.f32.mrf.mxu0
        %v1094 = vadd.f32 %v999, %v1093
        %v1095 = vpop.f32.mrf.mxu0
        %v1096 = vadd.f32 %v999, %v1095
        %1097 = vdwg.mxu0
        %v1098 = vmax.f32 %v1059, 0.0
        %v1099 = vmax.f32 %v1061, 0.0
        %v1100 = vmax.f32 %v1064, 0.0
        %v1101 = vmax.f32 %v1066, 0.0
        %v1102 = vmax.f32 %v1069, 0.0
        %v1103 = vmax.f32 %v1071, 0.0
        %v1104 = vmax.f32 %v1074, 0.0
        %v1105 = vmax.f32 %v1076, 0.0
        %v1106 = vmax.f32 %v1079, 0.0
        %v1107 = vmax.f32 %v1081, 0.0
        %v1108 = vmax.f32 %v1084, 0.0
        %v1109 = vmax.f32 %v1086, 0.0
        %v1110 = vmax.f32 %v1089, 0.0
        %v1111 = vmax.f32 %v1091, 0.0
        %v1112 = vmax.f32 %v1094, 0.0
        %v1113 = vmax.f32 %v1096, 0.0
        %v1114 = vld [vmem:[#allocation11] sm:$0xff]
        %v1115 = vld [vmem:[#allocation11 + $0x8] sm:$0xff]
        %v1116 = vld [vmem:[#allocation11 + $0x10] sm:$0xff]
        %v1117 = vld [vmem:[#allocation11 + $0x18] sm:$0xff]
        %v1118 = vld [vmem:[#allocation11 + $0x20] sm:$0xff]
        %v1119 = vld [vmem:[#allocation11 + $0x28] sm:$0xff]
        %v1120 = vld [vmem:[#allocation11 + $0x30] sm:$0xff]
        %v1121 = vld [vmem:[#allocation11 + $0x38] sm:$0xff]
        %v1122 = vld [vmem:[#allocation11 + $0x40] sm:$0xff]
        %v1123 = vld [vmem:[#allocation11 + $0x48] sm:$0xff]
        %v1124 = vld [vmem:[#allocation11 + $0x50] sm:$0xff]
        %v1125 = vld [vmem:[#allocation11 + $0x58] sm:$0xff]
        %v1126 = vld [vmem:[#allocation11 + $0x60] sm:$0xff]
        %v1127 = vld [vmem:[#allocation11 + $0x68] sm:$0xff]
        %v1128 = vld [vmem:[#allocation11 + $0x70] sm:$0xff]
        %v1129 = vld [vmem:[#allocation11 + $0x78] sm:$0xff]
        %v1130 = vpack.c.bf16 %v1099, %v1098
        %v1131 = vpack.c.bf16 %v1101, %v1100
        %v1132 = vpack.c.bf16 %v1103, %v1102
        %v1133 = vpack.c.bf16 %v1105, %v1104
        %v1134 = vpack.c.bf16 %v1107, %v1106
        %v1135 = vpack.c.bf16 %v1109, %v1108
        %v1136 = vpack.c.bf16 %v1111, %v1110
        %v1137 = vpack.c.bf16 %v1113, %v1112
        %v1138 = vld [vmem:[%s8] sm:$0x3]
        %v1140 = vperm.slane %v1138, 0
        %v1141 = vperm.slane %v1138, 1
        %v1160 = vunpack.c.l.b16 %v1114
        %v1161 = vunpack.c.h.b16 %v1114
        %v1162 = vunpack.c.l.b16 %v1115
        %v1163 = vunpack.c.h.b16 %v1115
        %v1164 = vunpack.c.l.b16 %v1116
        %v1165 = vunpack.c.h.b16 %v1116
        %v1166 = vunpack.c.l.b16 %v1117
        %v1167 = vunpack.c.h.b16 %v1117
        %v1168 = vunpack.c.l.b16 %v1118
        %v1169 = vunpack.c.h.b16 %v1118
        %v1170 = vunpack.c.l.b16 %v1119
        %v1171 = vunpack.c.h.b16 %v1119
        %v1172 = vunpack.c.l.b16 %v1120
        %v1173 = vunpack.c.h.b16 %v1120
        %v1174 = vunpack.c.l.b16 %v1121
        %v1175 = vunpack.c.h.b16 %v1121
        %v1176 = vunpack.c.l.b16 %v1122
        %v1177 = vunpack.c.h.b16 %v1122
        %v1178 = vunpack.c.l.b16 %v1123
        %v1179 = vunpack.c.h.b16 %v1123
        %v1180 = vunpack.c.l.b16 %v1124
        %v1181 = vunpack.c.h.b16 %v1124
        %v1182 = vunpack.c.l.b16 %v1125
        %v1183 = vunpack.c.h.b16 %v1125
        %v1184 = vunpack.c.l.b16 %v1126
        %v1185 = vunpack.c.h.b16 %v1126
        %v1186 = vunpack.c.l.b16 %v1127
        %v1187 = vunpack.c.h.b16 %v1127
        %v1188 = vunpack.c.l.b16 %v1128
        %v1189 = vunpack.c.h.b16 %v1128
        %v1190 = vunpack.c.l.b16 %v1129
        %v1191 = vunpack.c.h.b16 %v1129
        %v1192 = vpack.c.b16 %v1162, %v1160
        %v1193 = vpack.c.b16 %v1163, %v1161
        %v1194 = vpack.c.b16 %v1166, %v1164
        %v1195 = vpack.c.b16 %v1167, %v1165
        %v1196 = vpack.c.b16 %v1170, %v1168
        %v1197 = vpack.c.b16 %v1171, %v1169
        %v1198 = vpack.c.b16 %v1174, %v1172
        %v1199 = vpack.c.b16 %v1175, %v1173
        %v1200 = vpack.c.b16 %v1178, %v1176
        %v1201 = vpack.c.b16 %v1179, %v1177
        %v1202 = vpack.c.b16 %v1182, %v1180
        %v1203 = vpack.c.b16 %v1183, %v1181
        %v1204 = vpack.c.b16 %v1186, %v1184
        %v1205 = vpack.c.b16 %v1187, %v1185
        %v1206 = vpack.c.b16 %v1190, %v1188
        %v1207 = vpack.c.b16 %v1191, %v1189
        %1224 = vmatpush.bf16.msra.mxu0 %v1206
        %1225 = vmatpush.bf16.msra.mxu0 %v1204
        %1226 = vmatpush.bf16.msra.mxu0 %v1202
        %1227 = vmatpush.bf16.msra.mxu0 %v1200
        %1228 = vmatpush.bf16.msra.mxu0 %v1198
        %1229 = vmatpush.bf16.msra.mxu0 %v1196
        %1230 = vmatpush.bf16.msra.mxu0 %v1194
        %1231 = vmatpush.bf16.msra.mxu0 %v1192
        %1232 = vmatmul.bf16.gmra.mxu0 %v1130
        %v1233 = vpop.f32.mrf.mxu0
        %v1234 = vadd.f32 %v1140, %v1233
        %v1235 = vpop.f32.mrf.mxu0
        %v1236 = vadd.f32 %v1140, %v1235
        %1237 = vmatmul.bf16.gmra.mxu0 %v1131
        %v1238 = vpop.f32.mrf.mxu0
        %v1239 = vadd.f32 %v1140, %v1238
        %v1240 = vpop.f32.mrf.mxu0
        %v1241 = vadd.f32 %v1140, %v1240
        %1242 = vmatmul.bf16.gmra.mxu0 %v1132
        %v1243 = vpop.f32.mrf.mxu0
        %v1244 = vadd.f32 %v1140, %v1243
        %v1245 = vpop.f32.mrf.mxu0
        %v1246 = vadd.f32 %v1140, %v1245
        %1247 = vmatmul.bf16.gmra.mxu0 %v1133
        %v1248 = vpop.f32.mrf.mxu0
        %v1249 = vadd.f32 %v1140, %v1248
        %v1250 = vpop.f32.mrf.mxu0
        %v1251 = vadd.f32 %v1140, %v1250
        %1252 = vmatmul.bf16.gmra.mxu0 %v1134
        %v1253 = vpop.f32.mrf.mxu0
        %v1254 = vadd.f32 %v1140, %v1253
        %v1255 = vpop.f32.mrf.mxu0
        %v1256 = vadd.f32 %v1140, %v1255
        %1257 = vmatmul.bf16.gmra.mxu0 %v1135
        %v1258 = vpop.f32.mrf.mxu0
        %v1259 = vadd.f32 %v1140, %v1258
        %v1260 = vpop.f32.mrf.mxu0
        %v1261 = vadd.f32 %v1140, %v1260
        %1262 = vmatmul.bf16.gmra.mxu0 %v1136
        %v1263 = vpop.f32.mrf.mxu0
        %v1264 = vadd.f32 %v1140, %v1263
        %v1265 = vpop.f32.mrf.mxu0
        %v1266 = vadd.f32 %v1140, %v1265
        %1267 = vmatmul.bf16.gmra.mxu0 %v1137
        %v1268 = vpop.f32.mrf.mxu0
        %v1269 = vadd.f32 %v1140, %v1268
        %v1270 = vpop.f32.mrf.mxu0
        %v1271 = vadd.f32 %v1140, %v1270
        %1272 = vdwg.mxu0
        %1273 = vmatpush.bf16.msra.mxu0 %v1207
        %1274 = vmatpush.bf16.msra.mxu0 %v1205
        %1275 = vmatpush.bf16.msra.mxu0 %v1203
        %1276 = vmatpush.bf16.msra.mxu0 %v1201
        %1277 = vmatpush.bf16.msra.mxu0 %v1199
        %1278 = vmatpush.bf16.msra.mxu0 %v1197
        %1279 = vmatpush.bf16.msra.mxu0 %v1195
        %1280 = vmatpush.bf16.msra.mxu0 %v1193
        %1281 = vmatmul.bf16.gmra.mxu0 %v1130
        %v1282 = vpop.f32.mrf.mxu0
        %v1283 = vadd.f32 %v1141, %v1282
        %v1284 = vpop.f32.mrf.mxu0
        %v1285 = vadd.f32 %v1141, %v1284
        %1286 = vmatmul.bf16.gmra.mxu0 %v1131
        %v1287 = vpop.f32.mrf.mxu0
        %v1288 = vadd.f32 %v1141, %v1287
        %v1289 = vpop.f32.mrf.mxu0
        %v1290 = vadd.f32 %v1141, %v1289
        %1291 = vmatmul.bf16.gmra.mxu0 %v1132
        %v1292 = vpop.f32.mrf.mxu0
        %v1293 = vadd.f32 %v1141, %v1292
        %v1294 = vpop.f32.mrf.mxu0
        %v1295 = vadd.f32 %v1141, %v1294
        %1296 = vmatmul.bf16.gmra.mxu0 %v1133
        %v1297 = vpop.f32.mrf.mxu0
        %v1298 = vadd.f32 %v1141, %v1297
        %v1299 = vpop.f32.mrf.mxu0
        %v1300 = vadd.f32 %v1141, %v1299
        %1301 = vmatmul.bf16.gmra.mxu0 %v1134
        %v1302 = vpop.f32.mrf.mxu0
        %v1303 = vadd.f32 %v1141, %v1302
        %v1304 = vpop.f32.mrf.mxu0
        %v1305 = vadd.f32 %v1141, %v1304
        %1306 = vmatmul.bf16.gmra.mxu0 %v1135
        %v1307 = vpop.f32.mrf.mxu0
        %v1308 = vadd.f32 %v1141, %v1307
        %v1309 = vpop.f32.mrf.mxu0
        %v1310 = vadd.f32 %v1141, %v1309
        %1311 = vmatmul.bf16.gmra.mxu0 %v1136
        %v1312 = vpop.f32.mrf.mxu0
        %v1313 = vadd.f32 %v1141, %v1312
        %v1314 = vpop.f32.mrf.mxu0
        %v1315 = vadd.f32 %v1141, %v1314
        %1316 = vmatmul.bf16.gmra.mxu0 %v1137
        %v1317 = vpop.f32.mrf.mxu0
        %v1318 = vadd.f32 %v1141, %v1317
        %v1319 = vpop.f32.mrf.mxu0
        %v1320 = vadd.f32 %v1141, %v1319
        %1321 = vdwg.mxu0
        %v1322 = vmax.f32 %v1234, 0.0
        %v1323 = vmax.f32 %v1283, 0.0
        %v1324 = vmax.f32 %v1236, 0.0
        %v1325 = vmax.f32 %v1285, 0.0
        %v1326 = vmax.f32 %v1239, 0.0
        %v1327 = vmax.f32 %v1288, 0.0
        %v1328 = vmax.f32 %v1241, 0.0
        %v1329 = vmax.f32 %v1290, 0.0
        %v1330 = vmax.f32 %v1244, 0.0
        %v1331 = vmax.f32 %v1293, 0.0
        %v1332 = vmax.f32 %v1246, 0.0
        %v1333 = vmax.f32 %v1295, 0.0
        %v1334 = vmax.f32 %v1249, 0.0
        %v1335 = vmax.f32 %v1298, 0.0
        %v1336 = vmax.f32 %v1251, 0.0
        %v1337 = vmax.f32 %v1300, 0.0
        %v1338 = vmax.f32 %v1254, 0.0
        %v1339 = vmax.f32 %v1303, 0.0
        %v1340 = vmax.f32 %v1256, 0.0
        %v1341 = vmax.f32 %v1305, 0.0
        %v1342 = vmax.f32 %v1259, 0.0
        %v1343 = vmax.f32 %v1308, 0.0
        %v1344 = vmax.f32 %v1261, 0.0
        %v1345 = vmax.f32 %v1310, 0.0
        %v1346 = vmax.f32 %v1264, 0.0
        %v1347 = vmax.f32 %v1313, 0.0
        %v1348 = vmax.f32 %v1266, 0.0
        %v1349 = vmax.f32 %v1315, 0.0
        %v1350 = vmax.f32 %v1269, 0.0
        %v1351 = vmax.f32 %v1318, 0.0
        %v1352 = vmax.f32 %v1271, 0.0
        %v1353 = vmax.f32 %v1320, 0.0
        %1354 = vst [vmem:[%s535] sm:$0xff] %v1322
        %1355 = vst [vmem:[%s535 + $0x8] sm:$0xff] %v1323
        %1356 = vst [vmem:[%s535 + $0x10] sm:$0xff] %v1324
        %1357 = vst [vmem:[%s535 + $0x18] sm:$0xff] %v1325
        %1358 = vst [vmem:[%s535 + $0x20] sm:$0xff] %v1326
        %1359 = vst [vmem:[%s535 + $0x28] sm:$0xff] %v1327
        %1360 = vst [vmem:[%s535 + $0x30] sm:$0xff] %v1328
        %1361 = vst [vmem:[%s535 + $0x38] sm:$0xff] %v1329
        %1362 = vst [vmem:[%s535 + $0x40] sm:$0xff] %v1330
        %1363 = vst [vmem:[%s535 + $0x48] sm:$0xff] %v1331
        %1364 = vst [vmem:[%s535 + $0x50] sm:$0xff] %v1332
        %1365 = vst [vmem:[%s535 + $0x58] sm:$0xff] %v1333
        %1366 = vst [vmem:[%s535 + $0x60] sm:$0xff] %v1334
        %1367 = vst [vmem:[%s535 + $0x68] sm:$0xff] %v1335
        %1368 = vst [vmem:[%s535 + $0x70] sm:$0xff] %v1336
        %1369 = vst [vmem:[%s535 + $0x78] sm:$0xff] %v1337
        %1370 = vst [vmem:[%s535 + $0x80] sm:$0xff] %v1338
        %1371 = vst [vmem:[%s535 + $0x88] sm:$0xff] %v1339
        %1372 = vst [vmem:[%s535 + $0x90] sm:$0xff] %v1340
        %1373 = vst [vmem:[%s535 + $0x98] sm:$0xff] %v1341
        %1374 = vst [vmem:[%s535 + $0xa0] sm:$0xff] %v1342
        %1375 = vst [vmem:[%s535 + $0xa8] sm:$0xff] %v1343
        %1376 = vst [vmem:[%s535 + $0xb0] sm:$0xff] %v1344
        %1377 = vst [vmem:[%s535 + $0xb8] sm:$0xff] %v1345
        %1378 = vst [vmem:[%s535 + $0xc0] sm:$0xff] %v1346
        %1379 = vst [vmem:[%s535 + $0xc8] sm:$0xff] %v1347
        %1380 = vst [vmem:[%s535 + $0xd0] sm:$0xff] %v1348
        %1381 = vst [vmem:[%s535 + $0xd8] sm:$0xff] %v1349
        %1382 = vst [vmem:[%s535 + $0xe0] sm:$0xff] %v1350
        %1383 = vst [vmem:[%s535 + $0xe8] sm:$0xff] %v1351
        %1384 = vst [vmem:[%s535 + $0xf0] sm:$0xff] %v1352
        %1385 = vst [vmem:[%s535 + $0xf8] sm:$0xff] %v1353
        %1386 = vst [vmem:[%s542] sm:$0xff] %v934
        %1387 = vst [vmem:[%s542 + $0x8] sm:$0xff] %v936
        %1388 = vst [vmem:[%s542 + $0x10] sm:$0xff] %v939
        %1389 = vst [vmem:[%s542 + $0x18] sm:$0xff] %v941
        %1390 = vst [vmem:[%s542 + $0x20] sm:$0xff] %v944
        %1391 = vst [vmem:[%s542 + $0x28] sm:$0xff] %v946
        %1392 = vst [vmem:[%s542 + $0x30] sm:$0xff] %v949
        %1393 = vst [vmem:[%s542 + $0x38] sm:$0xff] %v951
        %1394 = vst [vmem:[%s542 + $0x40] sm:$0xff] %v954
        %1395 = vst [vmem:[%s542 + $0x48] sm:$0xff] %v956
        %1396 = vst [vmem:[%s542 + $0x50] sm:$0xff] %v959
        %1397 = vst [vmem:[%s542 + $0x58] sm:$0xff] %v961
        %1398 = vst [vmem:[%s542 + $0x60] sm:$0xff] %v964
        %1399 = vst [vmem:[%s542 + $0x68] sm:$0xff] %v966
        %1400 = vst [vmem:[%s542 + $0x70] sm:$0xff] %v969
        %1401 = vst [vmem:[%s542 + $0x78] sm:$0xff] %v971
        %v1402 = vld [vmem:[#allocation13] sm:$0xf]
        %v1403 = vld [vmem:[#allocation13 + $0x4] sm:$0xf]
        %v1404 = vld [vmem:[#allocation13 + $0x8] sm:$0xf]
        %v1405 = vld [vmem:[#allocation13 + $0xc] sm:$0xf]
        %v1406 = vld [vmem:[#allocation13 + $0x10] sm:$0xf]
        %v1407 = vld [vmem:[#allocation13 + $0x14] sm:$0xf]
        %v1408 = vld [vmem:[#allocation13 + $0x18] sm:$0xf]
        %v1409 = vld [vmem:[#allocation13 + $0x1c] sm:$0xf]
        %v1410 = vld [vmem:[#allocation13 + $0x20] sm:$0xf]
        %v1411 = vld [vmem:[#allocation13 + $0x24] sm:$0xf]
        %v1412 = vld [vmem:[#allocation13 + $0x28] sm:$0xf]
        %v1413 = vld [vmem:[#allocation13 + $0x2c] sm:$0xf]
        %v1414 = vld [vmem:[#allocation13 + $0x30] sm:$0xf]
        %v1415 = vld [vmem:[#allocation13 + $0x34] sm:$0xf]
        %v1416 = vld [vmem:[#allocation13 + $0x38] sm:$0xf]
        %v1417 = vld [vmem:[#allocation13 + $0x3c] sm:$0xf]
        %v1418 = vld [vmem:[#allocation13 + $0x40] sm:$0xf]
        %v1419 = vld [vmem:[#allocation13 + $0x44] sm:$0xf]
        %v1420 = vld [vmem:[#allocation13 + $0x48] sm:$0xf]
        %v1421 = vld [vmem:[#allocation13 + $0x4c] sm:$0xf]
        %v1422 = vld [vmem:[#allocation13 + $0x50] sm:$0xf]
        %v1423 = vld [vmem:[#allocation13 + $0x54] sm:$0xf]
        %v1424 = vld [vmem:[#allocation13 + $0x58] sm:$0xf]
        %v1425 = vld [vmem:[#allocation13 + $0x5c] sm:$0xf]
        %v1426 = vld [vmem:[#allocation13 + $0x60] sm:$0xf]
        %v1427 = vld [vmem:[#allocation13 + $0x64] sm:$0xf]
        %v1428 = vld [vmem:[#allocation13 + $0x68] sm:$0xf]
        %v1429 = vld [vmem:[#allocation13 + $0x6c] sm:$0xf]
        %v1430 = vld [vmem:[#allocation13 + $0x70] sm:$0xf]
        %v1431 = vld [vmem:[#allocation13 + $0x74] sm:$0xf]
        %v1432 = vld [vmem:[#allocation13 + $0x78] sm:$0xf]
        %v1433 = vld [vmem:[#allocation13 + $0x7c] sm:$0xf]
        %v1466 = vunpack.c.l.b16 %v1402
        %v1467 = vunpack.c.l.b16 %v1403
        %v1468 = vunpack.c.l.b16 %v1404
        %v1469 = vunpack.c.l.b16 %v1405
        %v1470 = vunpack.c.l.b16 %v1406
        %v1471 = vunpack.c.l.b16 %v1407
        %v1472 = vunpack.c.l.b16 %v1408
        %v1473 = vunpack.c.l.b16 %v1409
        %v1474 = vunpack.c.l.b16 %v1410
        %v1475 = vunpack.c.l.b16 %v1411
        %v1476 = vunpack.c.l.b16 %v1412
        %v1477 = vunpack.c.l.b16 %v1413
        %v1478 = vunpack.c.l.b16 %v1414
        %v1479 = vunpack.c.l.b16 %v1415
        %v1480 = vunpack.c.l.b16 %v1416
        %v1481 = vunpack.c.l.b16 %v1417
        %v1482 = vunpack.c.l.b16 %v1418
        %v1483 = vunpack.c.l.b16 %v1419
        %v1484 = vunpack.c.l.b16 %v1420
        %v1485 = vunpack.c.l.b16 %v1421
        %v1486 = vunpack.c.l.b16 %v1422
        %v1487 = vunpack.c.l.b16 %v1423
        %v1488 = vunpack.c.l.b16 %v1424
        %v1489 = vunpack.c.l.b16 %v1425
        %v1490 = vunpack.c.l.b16 %v1426
        %v1491 = vunpack.c.l.b16 %v1427
        %v1492 = vunpack.c.l.b16 %v1428
        %v1493 = vunpack.c.l.b16 %v1429
        %v1494 = vunpack.c.l.b16 %v1430
        %v1495 = vunpack.c.l.b16 %v1431
        %v1496 = vunpack.c.l.b16 %v1432
        %v1497 = vunpack.c.l.b16 %v1433
        %v1498 = vpack.c.b16 %v1467, %v1466
        %v1499 = vpack.c.b16 %v1469, %v1468
        %v1500 = vpack.c.b16 %v1471, %v1470
        %v1501 = vpack.c.b16 %v1473, %v1472
        %v1502 = vpack.c.b16 %v1475, %v1474
        %v1503 = vpack.c.b16 %v1477, %v1476
        %v1504 = vpack.c.b16 %v1479, %v1478
        %v1505 = vpack.c.b16 %v1481, %v1480
        %v1506 = vpack.c.b16 %v1483, %v1482
        %v1507 = vpack.c.b16 %v1485, %v1484
        %v1508 = vpack.c.b16 %v1487, %v1486
        %v1509 = vpack.c.b16 %v1489, %v1488
        %v1510 = vpack.c.b16 %v1491, %v1490
        %v1511 = vpack.c.b16 %v1493, %v1492
        %v1512 = vpack.c.b16 %v1495, %v1494
        %v1513 = vpack.c.b16 %v1497, %v1496
        %1530 = vmatpush.bf16.msra.mxu0 %v1505
        %1531 = vmatpush.bf16.msra.mxu0 %v1504
        %1532 = vmatpush.bf16.msra.mxu0 %v1503
        %1533 = vmatpush.bf16.msra.mxu0 %v1502
        %1534 = vmatpush.bf16.msra.mxu0 %v1501
        %1535 = vmatpush.bf16.msra.mxu0 %v1500
        %1536 = vmatpush.bf16.msra.mxu0 %v1499
        %1537 = vmatpush.bf16.msra.mxu0 %v1498
        %1538 = vmatmul.bf16.gmra.mxu0 %v586
        %v1539 = vpop.f32.mrf.mxu0
        %v1540 = vadd.f32 0.0, %v1539
        %v1541 = vpop.f32.mrf.mxu0
        %v1542 = vadd.f32 0.0, %v1541
        %1543 = vmatmul.bf16.gmra.mxu0 %v588
        %v1544 = vpop.f32.mrf.mxu0
        %v1545 = vadd.f32 0.0, %v1544
        %v1546 = vpop.f32.mrf.mxu0
        %v1547 = vadd.f32 0.0, %v1546
        %1548 = vmatmul.bf16.gmra.mxu0 %v590
        %v1549 = vpop.f32.mrf.mxu0
        %v1550 = vadd.f32 0.0, %v1549
        %v1551 = vpop.f32.mrf.mxu0
        %v1552 = vadd.f32 0.0, %v1551
        %1553 = vmatmul.bf16.gmra.mxu0 %v592
        %v1554 = vpop.f32.mrf.mxu0
        %v1555 = vadd.f32 0.0, %v1554
        %v1556 = vpop.f32.mrf.mxu0
        %v1557 = vadd.f32 0.0, %v1556
        %1558 = vmatmul.bf16.gmra.mxu0 %v594
        %v1559 = vpop.f32.mrf.mxu0
        %v1560 = vadd.f32 0.0, %v1559
        %v1561 = vpop.f32.mrf.mxu0
        %v1562 = vadd.f32 0.0, %v1561
        %1563 = vmatmul.bf16.gmra.mxu0 %v596
        %v1564 = vpop.f32.mrf.mxu0
        %v1565 = vadd.f32 0.0, %v1564
        %v1566 = vpop.f32.mrf.mxu0
        %v1567 = vadd.f32 0.0, %v1566
        %1568 = vmatmul.bf16.gmra.mxu0 %v598
        %v1569 = vpop.f32.mrf.mxu0
        %v1570 = vadd.f32 0.0, %v1569
        %v1571 = vpop.f32.mrf.mxu0
        %v1572 = vadd.f32 0.0, %v1571
        %1573 = vmatmul.bf16.gmra.mxu0 %v600
        %v1574 = vpop.f32.mrf.mxu0
        %v1575 = vadd.f32 0.0, %v1574
        %v1576 = vpop.f32.mrf.mxu0
        %v1577 = vadd.f32 0.0, %v1576
        %1578 = vdwg.mxu0
        %1579 = vmatpush.bf16.msra.mxu0 %v1513
        %1580 = vmatpush.bf16.msra.mxu0 %v1512
        %1581 = vmatpush.bf16.msra.mxu0 %v1511
        %1582 = vmatpush.bf16.msra.mxu0 %v1510
        %1583 = vmatpush.bf16.msra.mxu0 %v1509
        %1584 = vmatpush.bf16.msra.mxu0 %v1508
        %1585 = vmatpush.bf16.msra.mxu0 %v1507
        %1586 = vmatpush.bf16.msra.mxu0 %v1506
        %1587 = vmatmul.bf16.gmra.mxu0 %v587
        %v1588 = vpop.f32.mrf.mxu0
        %v1589 = vadd.f32 %v1540, %v1588
        %v1590 = vpop.f32.mrf.mxu0
        %v1591 = vadd.f32 %v1542, %v1590
        %1592 = vmatmul.bf16.gmra.mxu0 %v589
        %v1593 = vpop.f32.mrf.mxu0
        %v1594 = vadd.f32 %v1545, %v1593
        %v1595 = vpop.f32.mrf.mxu0
        %v1596 = vadd.f32 %v1547, %v1595
        %1597 = vmatmul.bf16.gmra.mxu0 %v591
        %v1598 = vpop.f32.mrf.mxu0
        %v1599 = vadd.f32 %v1550, %v1598
        %v1600 = vpop.f32.mrf.mxu0
        %v1601 = vadd.f32 %v1552, %v1600
        %1602 = vmatmul.bf16.gmra.mxu0 %v593
        %v1603 = vpop.f32.mrf.mxu0
        %v1604 = vadd.f32 %v1555, %v1603
        %v1605 = vpop.f32.mrf.mxu0
        %v1606 = vadd.f32 %v1557, %v1605
        %1607 = vmatmul.bf16.gmra.mxu0 %v595
        %v1608 = vpop.f32.mrf.mxu0
        %v1609 = vadd.f32 %v1560, %v1608
        %v1610 = vpop.f32.mrf.mxu0
        %v1611 = vadd.f32 %v1562, %v1610
        %1612 = vmatmul.bf16.gmra.mxu0 %v597
        %v1613 = vpop.f32.mrf.mxu0
        %v1614 = vadd.f32 %v1565, %v1613
        %v1615 = vpop.f32.mrf.mxu0
        %v1616 = vadd.f32 %v1567, %v1615
        %1617 = vmatmul.bf16.gmra.mxu0 %v599
        %v1618 = vpop.f32.mrf.mxu0
        %v1619 = vadd.f32 %v1570, %v1618
        %v1620 = vpop.f32.mrf.mxu0
        %v1621 = vadd.f32 %v1572, %v1620
        %1622 = vmatmul.bf16.gmra.mxu0 %v601
        %v1623 = vpop.f32.mrf.mxu0
        %v1624 = vadd.f32 %v1575, %v1623
        %v1625 = vpop.f32.mrf.mxu0
        %v1626 = vadd.f32 %v1577, %v1625
        %1627 = vdwg.mxu0
        %v1628 = vpack.c.bf16 %v1589, %v1589
        %v1629 = vpack.c.bf16 %v1591, %v1591
        %v1630 = vpack.c.bf16 %v1594, %v1594
        %v1631 = vpack.c.bf16 %v1596, %v1596
        %v1632 = vpack.c.bf16 %v1599, %v1599
        %v1633 = vpack.c.bf16 %v1601, %v1601
        %v1634 = vpack.c.bf16 %v1604, %v1604
        %v1635 = vpack.c.bf16 %v1606, %v1606
        %v1636 = vpack.c.bf16 %v1609, %v1609
        %v1637 = vpack.c.bf16 %v1611, %v1611
        %v1638 = vpack.c.bf16 %v1614, %v1614
        %v1639 = vpack.c.bf16 %v1616, %v1616
        %v1640 = vpack.c.bf16 %v1619, %v1619
        %v1641 = vpack.c.bf16 %v1621, %v1621
        %v1642 = vpack.c.bf16 %v1624, %v1624
        %v1643 = vpack.c.bf16 %v1626, %v1626
        %1644 = vst [vmem:[%s549] sm:$0xf] %v1628
        %1645 = vst [vmem:[%s549 + $0x4] sm:$0xf] %v1629
        %1646 = vst [vmem:[%s549 + $0x8] sm:$0xf] %v1630
        %1647 = vst [vmem:[%s549 + $0xc] sm:$0xf] %v1631
        %1648 = vst [vmem:[%s549 + $0x10] sm:$0xf] %v1632
        %1649 = vst [vmem:[%s549 + $0x14] sm:$0xf] %v1633
        %1650 = vst [vmem:[%s549 + $0x18] sm:$0xf] %v1634
        %1651 = vst [vmem:[%s549 + $0x1c] sm:$0xf] %v1635
        %1652 = vst [vmem:[%s549 + $0x20] sm:$0xf] %v1636
        %1653 = vst [vmem:[%s549 + $0x24] sm:$0xf] %v1637
        %1654 = vst [vmem:[%s549 + $0x28] sm:$0xf] %v1638
        %1655 = vst [vmem:[%s549 + $0x2c] sm:$0xf] %v1639
        %1656 = vst [vmem:[%s549 + $0x30] sm:$0xf] %v1640
        %1657 = vst [vmem:[%s549 + $0x34] sm:$0xf] %v1641
        %1658 = vst [vmem:[%s549 + $0x38] sm:$0xf] %v1642
        %1659 = vst [vmem:[%s549 + $0x3c] sm:$0xf] %v1643
        %s1660 = sand.u32 %s259, 1
        %s1661 = scalar_lea.sflag [#allocation4], %s1660
        %s1662 = sand.u32 %s259, 1
        %s1663 = smul.addr %s1662, 256
        %s1664 = scalar_lea.vmem [#allocation14], %s1663
        %s1665 = sand.u32 %s36, 1
        %s1666 = scalar_lea.sflag [#allocation16], %s1665
        %s1667 = sand.u32 %s285, 1
        %s1668 = smul.addr %s1667, 128
        %s1669 = scalar_lea.vmem [#allocation15], %s1668
        %s1670 = sand.u32 %s36, 1
        %s1671 = scalar_lea.sflag [#allocation16], %s1670
        %s1672 = sand.u32 %s311, 1
        %s1673 = smul.addr %s1672, 64
        %s1674 = scalar_lea.vmem [#allocation17], %s1673
        // Predicated region
        $region89: #{tpu_custom_call.1} parent=59 // pred_check
          %p1675 = pneg %p269
        $region90: #{tpu_custom_call.1} parent=59 // pred_check_branch
          %1677 = sbr.rel (%p1675) target = $region92
        $region91: #{tpu_custom_call.1} parent=59 // pred_region
          %s1678 = smul.u32 16, %s36
          %1680 = vsyncadd %s1661, 0
          %s1681 = smul.addr %s1678, 2
          %s1682 = smul.addr %s1681, 8
          %s1683 = scalar_lea.hbm %s10, %s1682
          %s1684 = sshll.u32 %s1664, 4
          %s1685 = int_to_ptr.vmem [resolvable:$true] %s1684
          %s1686 = sshll.u32 %s1683, 4
          %s1687 = int_to_ptr.hbm [resolvable:$true] %s1686
          %1692 = dma.vmem_to_hbm [thread:$0]  %s1685, 4096, %s1687, %s1661, 256, 256, 16
        $region92: #{tpu_custom_call.1} parent=59 // pred_fallthru
          _
        // Predicated region
        $region93: #{tpu_custom_call.1} parent=59 // pred_check
          %p1693 = pneg %p295
        $region94: #{tpu_custom_call.1} parent=59 // pred_check_branch
          %1695 = sbr.rel (%p1693) target = $region96
        $region95: #{tpu_custom_call.1} parent=59 // pred_region
          %s1696 = smul.u32 16, %s36
          %1698 = vsyncadd %s1666, 0
          %s1699 = smul.addr %s1696, 8
          %s1700 = scalar_lea.hbm %s11, %s1699
          %s1701 = sshll.u32 %s1669, 4
          %s1702 = int_to_ptr.vmem [resolvable:$true] %s1701
          %s1703 = sshll.u32 %s1700, 4
          %s1704 = int_to_ptr.hbm [resolvable:$true] %s1703
          %1709 = dma.vmem_to_hbm [thread:$0]  %s1702, 2048, %s1704, %s1666, 128, 128, 8
        $region96: #{tpu_custom_call.1} parent=59 // pred_fallthru
          _
        // Predicated region
        $region97: #{tpu_custom_call.1} parent=59 // pred_check
          %p1710 = pneg %p321
        $region98: #{tpu_custom_call.1} parent=59 // pred_check_branch
          %1712 = sbr.rel (%p1710) target = $region100
        $region99: #{tpu_custom_call.1} parent=59 // pred_region
          %s1713 = smul.u32 16, %s36
          %1715 = vsyncadd %s1671, 0
          %s1716 = smul.addr %s1713, 4
          %s1717 = scalar_lea.hbm %s12, %s1716
          %s1718 = sshll.u32 %s1674, 4
          %s1719 = int_to_ptr.vmem [resolvable:$true] %s1718
          %s1720 = sshll.u32 %s1717, 4
          %s1721 = int_to_ptr.hbm [resolvable:$true] %s1720
          %1726 = dma.vmem_to_hbm [thread:$0]  %s1719, 1024, %s1721, %s1671, 64, 64, 4
        $region100: #{tpu_custom_call.1} parent=59 // pred_fallthru
          _
      $region60: #{tpu_custom_call.1} parent=5 // pred_fallthru
        _
      %p1727 = scmp.le.s32.totalorder 2, %s31
      // Predicated region
      $region101: #{tpu_custom_call.1} parent=5 // pred_check
        %p1728 = pneg %p1727
      $region102: #{tpu_custom_call.1} parent=5 // pred_check_branch
        %1730 = sbr.rel (%p1728) target = $region104
      $region103: #{tpu_custom_call.1} parent=5 // pred_region
        %s1731 = ssub.s32 %s31, 2
        // Predicated region
        $region105: #{tpu_custom_call.1} parent=103 // pred_check
          %p1732 = pneg %p275
        $region106: #{tpu_custom_call.1} parent=103 // pred_check_branch
          %1734 = sbr.rel (%p1732) target = $region108
        $region107: #{tpu_custom_call.1} parent=103 // pred_region
          %s1735 = sand.u32 %s260, 1
          %s1736 = scalar_lea.sflag [#allocation4], %s1735
          %s1737 = sand.u32 %s260, 1
          %s1738 = smul.addr %s1737, 256
          %s1739 = scalar_lea.vmem [#allocation14], %s1738
          %1741 = dma.done %s1736, 4096
        $region108: #{tpu_custom_call.1} parent=103 // pred_fallthru
          _
        // Predicated region
        $region109: #{tpu_custom_call.1} parent=103 // pred_check
          %p1742 = pneg %p301
        $region110: #{tpu_custom_call.1} parent=103 // pred_check_branch
          %1744 = sbr.rel (%p1742) target = $region112
        $region111: #{tpu_custom_call.1} parent=103 // pred_region
          %s1745 = sand.u32 %s37, 1
          %s1746 = scalar_lea.sflag [#allocation16], %s1745
          %s1747 = sand.u32 %s286, 1
          %s1748 = smul.addr %s1747, 128
          %s1749 = scalar_lea.vmem [#allocation15], %s1748
          %1751 = dma.done %s1746, 2048
        $region112: #{tpu_custom_call.1} parent=103 // pred_fallthru
          _
        // Predicated region
        $region113: #{tpu_custom_call.1} parent=103 // pred_check
          %p1752 = pneg %p327
        $region114: #{tpu_custom_call.1} parent=103 // pred_check_branch
          %1754 = sbr.rel (%p1752) target = $region116
        $region115: #{tpu_custom_call.1} parent=103 // pred_region
          %s1755 = sand.u32 %s37, 1
          %s1756 = scalar_lea.sflag [#allocation16], %s1755
          %s1757 = sand.u32 %s312, 1
          %s1758 = smul.addr %s1757, 64
          %s1759 = scalar_lea.vmem [#allocation17], %s1758
          %1761 = dma.done %s1756, 1024
        $region116: #{tpu_custom_call.1} parent=103 // pred_fallthru
          _
      $region104: #{tpu_custom_call.1} parent=5 // pred_fallthru
        _
    $region6: #{tpu_custom_call.1} parent=1 // loop_footer
      %s35 = sadd.s32 1, %s31
    $region7: #{tpu_custom_call.1} parent=1 // loop_footer_branch
      %30 = sbr.rel target = $region3
    $region8: #{tpu_custom_call.1} parent=1 // loop_exit
      _
    %1762 = vsyncpa [#allocation3], 1
    %s1763 = scalar_lea.sflag [#allocation3], 1
    %1764 = vsyncpa %s1763, 1
    %1765 = vsyncpa [#allocation6], 1
    %1766 = vsyncpa [#allocation9], 1
    %1767 = vsyncpa [#allocation12], 1
    %1768 = vsyncpa [#allocation4], 1
    %s1769 = scalar_lea.sflag [#allocation4], 1
    %1770 = vsyncpa %s1769, 1
    %1771 = vsyncpa [#allocation16], 1
    %s1772 = scalar_lea.sflag [#allocation16], 1
    %1773 = vsyncpa %s1772, 1

</llo_original>
